<compile_context>
chip_gen: v7x
topology: tpu7x:2x2x1
jax: 0.10.0
libtpu: 0.0.40
codegen_flags: <defaults>
</compile_context>

<pallas_src>
import functools
import math

import jax
import jax.numpy as jnp
import numpy as np
from jax import lax
from jax.experimental import pallas as pl
from jax.experimental.pallas import tpu as pltpu

_LANE = 128  # TPU lane width: feature dim is padded to a multiple of this.

try:
    _CompilerParams = pltpu.CompilerParams
except AttributeError:  # pragma: no cover — older JAX spelling
    _CompilerParams = pltpu.TPUCompilerParams


def _round_up(x, m):
    return (x + m - 1) // m * m


def _vmem_limit(streamed_bytes, constant_bytes, extra_bytes=0):
    """2x double-buffered streamed blocks + 1x constant-index blocks + headroom.

    Capped at 48 MiB so the request is always legal on v7x (64 MiB per TC)
    while leaving room for Mosaic internal scratch / semaphores.
    """
    est = 2 * int(streamed_bytes) + int(constant_bytes) + int(extra_bytes) + (4 << 20)
    return int(min(max(est, 8 << 20), 48 << 20))


def _layernorm(v, w, b, mask, inv_d, eps):
    """f32 LayerNorm with lane-padding mask (stats divide by the real dim)."""
    mu = jnp.sum(v, axis=-1, keepdims=True) * inv_d
    vc = (v - mu) * mask
    var = jnp.sum(vc * vc, axis=-1, keepdims=True) * inv_d
    return vc * lax.rsqrt(var + eps) * w + b


# ---------------------------------------------------------------------------
# Fully fused kernel (small graphs: everything VMEM-resident, one grid step)
# ---------------------------------------------------------------------------
def _fused_kernel(d_real, x_ref, a_ref, p_ref, w_in_ref, w_gcn_ref, w_out_ref, o_ref):
    eps = jnp.float32(1e-5)
    inv_d = jnp.float32(1.0 / d_real)
    dp = x_ref.shape[-1]
    lane = lax.broadcasted_iota(jnp.int32, (1, dp), 1)
    mask = (lane < d_real).astype(jnp.float32)

    p = p_ref[...]
    ln1_w, ln1_b, b_in = p[0:1, :], p[1:2, :], p[2:3, :]
    ln2_w, ln2_b = p[3:4, :], p[4:5, :]
    b_gcn, b_out = p[5:6, :], p[6:7, :]

    x = x_ref[...].astype(jnp.float32)

    h = _layernorm(x, ln1_w, ln1_b, mask, inv_d, eps)
    h = jnp.dot(h.astype(jnp.bfloat16), w_in_ref[...],
                preferred_element_type=jnp.float32) + b_in
    # exact (erf) GELU — torch.nn.functional.gelu default
    h = 0.5 * h * (1.0 + lax.erf(h * jnp.float32(1.0 / math.sqrt(2.0))))

    g = _layernorm(h, ln2_w, ln2_b, mask, inv_d, eps)
    g = jnp.dot(g.astype(jnp.bfloat16), w_gcn_ref[...],
                preferred_element_type=jnp.float32)
    g = jnp.dot(a_ref[...], g.astype(jnp.bfloat16),
                preferred_element_type=jnp.float32) + b_gcn

    hg = (jnp.tanh(g) * h).astype(jnp.bfloat16)          # tanh -> EUP slot
    o_ref[...] = (jnp.dot(hg, w_out_ref[...], preferred_element_type=jnp.float32)
                  + b_out).astype(o_ref.dtype)


# ---------------------------------------------------------------------------
# Stage 1 (streaming path): per-row-tile node pipeline
#   h = gelu(LN1(x) @ W_in + b_in);   g = LN2(h) @ W_gcn   (pre-aggregation)
# ---------------------------------------------------------------------------
def _stage1_kernel(d_real, x_ref, p_ref, w_in_ref, w_gcn_ref, h_ref, g_ref):
    eps = jnp.float32(1e-5)
    inv_d = jnp.float32(1.0 / d_real)
    dp = x_ref.shape[-1]
    lane = lax.broadcasted_iota(jnp.int32, (1, dp), 1)
    mask = (lane < d_real).astype(jnp.float32)

    p = p_ref[...]
    ln1_w, ln1_b, b_in = p[0:1, :], p[1:2, :], p[2:3, :]
    ln2_w, ln2_b = p[3:4, :], p[4:5, :]

    x = x_ref[...].astype(jnp.float32)
    h = _layernorm(x, ln1_w, ln1_b, mask, inv_d, eps)
    h = jnp.dot(h.astype(jnp.bfloat16), w_in_ref[...],
                preferred_element_type=jnp.float32) + b_in
    h = 0.5 * h * (1.0 + lax.erf(h * jnp.float32(1.0 / math.sqrt(2.0))))

    g = _layernorm(h, ln2_w, ln2_b, mask, inv_d, eps)
    g = jnp.dot(g.astype(jnp.bfloat16), w_gcn_ref[...],
                preferred_element_type=jnp.float32)

    h_ref[...] = h.astype(h_ref.dtype)   # bf16: halves the h HBM round-trip
    g_ref[...] = g.astype(g_ref.dtype)   # bf16: operand of A_hat @ g


# ---------------------------------------------------------------------------
# Stage 2 (streaming path): K-accumulated message passing + gate + proj_out
#   o += A[i,k] @ g[k];  last k: o = (tanh(o + b_gcn) * h[i]) @ W_out + b_out
# The output block index is constant across k, so o_ref stays VMEM-resident
# for the whole K loop and doubles as the f32 accumulator (no scratch needed).
# ---------------------------------------------------------------------------
def _stage2_kernel(tile_k, g_resident, a_ref, g_ref, h_ref, p_ref, w_out_ref, o_ref):
    k = pl.program_id(1)

    @pl.when(k == 0)
    def _():
        o_ref[...] = jnp.zeros_like(o_ref)

    if g_resident:
        off = pl.multiple_of(k * tile_k, tile_k)
        g_tile = g_ref[pl.ds(off, tile_k), :]      # slice of the resident g
    else:
        g_tile = g_ref[...]                        # streamed (tile_k, Dp) block

    o_ref[...] += jnp.dot(a_ref[...], g_tile, preferred_element_type=jnp.float32)

    @pl.when(k == pl.num_programs(1) - 1)
    def _():
        p = p_ref[...]
        b_gcn, b_out = p[5:6, :], p[6:7, :]
        gate = jnp.tanh(o_ref[...] + b_gcn)        # tanh -> EUP slot
        hg = (gate * h_ref[...].astype(jnp.float32)).astype(jnp.bfloat16)
        o_ref[...] = (jnp.dot(hg, w_out_ref[...], preferred_element_type=jnp.float32)
                      + b_out).astype(o_ref.dtype)


# ---------------------------------------------------------------------------
# Wrapper: padding, packing, path selection, BlockSpecs / grids
# ---------------------------------------------------------------------------
def gmlp_layer_pallas(x, a_hat, params, *, tile_n=256, tile_k=256,
                      force_two_stage=False):
    """x: (N, D) f32 node features, a_hat: (N, N) f32 normalized adjacency."""
    N, D = x.shape
    Dp = _round_up(D, _LANE)
    f32 = jnp.float32

    def pad_w(w):  # (D, D) -> (Dp, Dp) bf16, stored (in, out) so y = x @ W
        return jnp.zeros((Dp, Dp), f32).at[:D, :D].set(w.astype(f32)).astype(jnp.bfloat16)

    w_in, w_gcn, w_out = pad_w(params["w_in"]), pad_w(params["w_gcn"]), pad_w(params["w_out"])

    # Pack all (1, D) LayerNorm / bias vectors into one (8, Dp) block: one DMA.
    packed = jnp.zeros((8, Dp), f32)
    for idx, name in enumerate(
        ["ln1_w", "ln1_b", "b_in", "ln2_w", "ln2_b", "b_gcn", "b_out"]
    ):
        packed = packed.at[idx, :D].set(jnp.reshape(params[name].astype(f32), (-1,))[:D])

    weight_bytes = 3 * Dp * Dp * 2 + 8 * Dp * 4

    # ----------------- fused single-call path (small graphs) -----------------
    Np_f = _round_up(N, _LANE)
    fused_bytes = (Np_f * Dp * 4 + Np_f * Np_f * 2 + Np_f * Dp * 4
                   + weight_bytes + 6 * Np_f * Dp * 4)   # + f32 intermediates
    if (not force_two_stage) and fused_bytes <= (24 << 20):
        Np = Np_f
        x_p = jnp.zeros((Np, Dp), f32).at[:N, :D].set(x.astype(f32))
        a_p = jnp.zeros((Np, Np), f32).at[:N, :N].set(a_hat.astype(f32)).astype(jnp.bfloat16)
        c = lambda i: (0, 0)
        out_p = pl.pallas_call(
            functools.partial(_fused_kernel, D),
            out_shape=jax.ShapeDtypeStruct((Np, Dp), f32),
            grid=(1,),
            in_specs=[
                pl.BlockSpec((Np, Dp), c),     # x
                pl.BlockSpec((Np, Np), c),     # A_hat (bf16)
                pl.BlockSpec((8, Dp), c),      # packed LN/bias params
                pl.BlockSpec((Dp, Dp), c),     # W_in
                pl.BlockSpec((Dp, Dp), c),     # W_gcn
                pl.BlockSpec((Dp, Dp), c),     # W_out
            ],
            out_specs=pl.BlockSpec((Np, Dp), c),
            compiler_params=_CompilerParams(
                dimension_semantics=("arbitrary",),
                vmem_limit_bytes=int(min(max(fused_bytes + (8 << 20), 16 << 20), 48 << 20)),
            ),
        )(x_p, a_p, packed, w_in, w_gcn, w_out)
        return out_p[:N, :D]

    # ----------------- two-stage streaming path (large graphs) ---------------
    # Megacore guard (v7x): keep >= 2 row tiles so both TensorCores have work.
    if _round_up(N, 128) < 2 * tile_n:
        tile_n = 128
    Np = _round_up(N, math.lcm(tile_n, tile_k))

    x_p = jnp.zeros((Np, Dp), f32).at[:N, :D].set(x.astype(f32))
    a_p = jnp.zeros((Np, Np), f32).at[:N, :N].set(a_hat.astype(f32)).astype(jnp.bfloat16)

    # ---- stage 1: row-tiled, weights resident ----
    s1_streamed = tile_n * Dp * (4 + 2 + 2)            # x(f32) + h,g(bf16) out
    s1_const = 8 * Dp * 4 + 2 * Dp * Dp * 2            # packed + W_in + W_gcn
    # TODO(synk): for Dp >= ~2048 on v7x, split W_in/W_gcn along an extra grid
    # axis instead of keeping both fully resident (64 MiB/TC VMEM budget).
    h_pad, g_pad = pl.pallas_call(
        functools.partial(_stage1_kernel, D),
        out_shape=(jax.ShapeDtypeStruct((Np, Dp), jnp.bfloat16),
                   jax.ShapeDtypeStruct((Np, Dp), jnp.bfloat16)),
        grid=(Np // tile_n,),
        in_specs=[
            pl.BlockSpec((tile_n, Dp), lambda i: (i, 0)),   # x rows
            pl.BlockSpec((8, Dp), lambda i: (0, 0)),        # packed LN/bias
            pl.BlockSpec((Dp, Dp), lambda i: (0, 0)),       # W_in  (resident)
            pl.BlockSpec((Dp, Dp), lambda i: (0, 0)),       # W_gcn (resident)
        ],
        out_specs=[
            pl.BlockSpec((tile_n, Dp), lambda i: (i, 0)),   # h (bf16)
            pl.BlockSpec((tile_n, Dp), lambda i: (i, 0)),   # g (bf16, pre-agg)
        ],
        compiler_params=_CompilerParams(
            dimension_semantics=("parallel",),
            vmem_limit_bytes=_vmem_limit(s1_streamed, s1_const),
        ),
    )(x_p, packed, w_in, w_gcn)

    # ---- stage 2: row tiles x K-accumulation over adjacency column tiles ----
    g_resident = (Np * Dp * 2) <= (8 << 20)   # keep g fully in VMEM if small
    if g_resident:
        g_spec = pl.BlockSpec((Np, Dp), lambda i, k: (0, 0))
    else:
        g_spec = pl.BlockSpec((tile_k, Dp), lambda i, k: (k, 0))

    s2_streamed = (tile_n * tile_k * 2 + tile_n * Dp * 2 + tile_n * Dp * 4
                   + (0 if g_resident else tile_k * Dp * 2))
    s2_const = 8 * Dp * 4 + Dp * Dp * 2 + (Np * Dp * 2 if g_resident else 0)

    out_p = pl.pallas_call(
        functools.partial(_stage2_kernel, tile_k, g_resident),
        out_shape=jax.ShapeDtypeStruct((Np, Dp), f32),
        grid=(Np // tile_n, Np // tile_k),
        in_specs=[
            pl.BlockSpec((tile_n, tile_k), lambda i, k: (i, k)),  # A_hat tile
            g_spec,                                               # g (resident or streamed)
            pl.BlockSpec((tile_n, Dp), lambda i, k: (i, 0)),      # h[i] tile
            pl.BlockSpec((8, Dp), lambda i, k: (0, 0)),           # packed params
            pl.BlockSpec((Dp, Dp), lambda i, k: (0, 0)),          # W_out (resident)
        ],
        out_specs=pl.BlockSpec((tile_n, Dp), lambda i, k: (i, 0)),
        compiler_params=_CompilerParams(
            dimension_semantics=("parallel", "arbitrary"),
            vmem_limit_bytes=_vmem_limit(s2_streamed, s2_const),
        ),
    )(a_p, g_pad, h_pad, packed, w_out)

    return out_p[:N, :D]


# ---------------------------------------------------------------------------
# Glue: GCN symmetric normalization as a dense adjacency (plain JAX)
# ---------------------------------------------------------------------------
def gcn_norm_dense(edge_index, num_nodes):
    """A_hat[i, j] = deg^-1/2[j] * deg^-1/2[i] for edge j->i, with self loops."""
    src, dst = edge_index[0], edge_index[1]
    loop = jnp.arange(num_nodes, dtype=src.dtype)
    src = jnp.concatenate([src, loop])
    dst = jnp.concatenate([dst, loop])
    ew = jnp.ones(src.shape[0], dtype=jnp.float32)
    deg = jnp.zeros((num_nodes,), jnp.float32).at[dst].add(ew)
    dinv = jnp.where(deg > 0, lax.rsqrt(jnp.maximum(deg, 1e-12)), 0.0)
    norm = dinv[src] * dinv[dst]
    return jnp.zeros((num_nodes, num_nodes), jnp.float32).at[dst, src].add(norm)


# ---------------------------------------------------------------------------
# Deterministic parameter init (mirrors module __init__)
# ---------------------------------------------------------------------------
def init_params(key, h_dim):
    k_in_w, k_in_b, k_gcn, k_out_w, k_out_b = jax.random.split(key, 5)
    bound = 1.0 / math.sqrt(h_dim)
    init_eps = 0.001 / h_dim
    return {
        "ln1_w": jnp.ones((1, h_dim), jnp.float32),
        "ln1_b": jnp.zeros((1, h_dim), jnp.float32),
        "ln2_w": jnp.ones((1, h_dim), jnp.float32),
        "ln2_b": jnp.zeros((1, h_dim), jnp.float32),
        "w_in": jax.random.uniform(k_in_w, (h_dim, h_dim), jnp.float32, -bound, bound),
        "b_in": jax.random.uniform(k_in_b, (1, h_dim), jnp.float32, -bound, bound),
        "w_out": jax.random.uniform(k_out_w, (h_dim, h_dim), jnp.float32, -bound, bound),
        "b_out": jax.random.uniform(k_out_b, (1, h_dim), jnp.float32, -bound, bound),
        "w_gcn": jax.random.uniform(k_gcn, (h_dim, h_dim), jnp.float32, -init_eps, init_eps),
        "b_gcn": jnp.ones((1, h_dim), jnp.float32),
    }


# ---------------------------------------------------------------------------
# Pure-JAX (f32) reference for the correctness check
# ---------------------------------------------------------------------------
def gmlp_layer_ref(x, a_hat, p):
    def ln(v, w, b):
        mu = jnp.mean(v, -1, keepdims=True)
        var = jnp.mean((v - mu) ** 2, -1, keepdims=True)
        return (v - mu) * lax.rsqrt(var + 1e-5) * w + b

    h = ln(x, p["ln1_w"], p["ln1_b"])
    h = h @ p["w_in"] + p["b_in"]
    h = 0.5 * h * (1.0 + lax.erf(h / math.sqrt(2.0)))
    g = ln(h, p["ln2_w"], p["ln2_b"])
    g = a_hat @ (g @ p["w_gcn"]) + p["b_gcn"]
    h = jnp.tanh(g) * h
    return h @ p["w_out"] + p["b_out"]


if __name__ == "__main__":
    key = jax.random.PRNGKey(0)
    k_x1, k_p1, k_x2, k_p2 = jax.random.split(key, 4)

    def ring_edges(n):
        # Deterministic bidirectional ring graph: (i -> i+1) and (i+1 -> i).
        src = np.arange(n)
        dst = (src + 1) % n
        return jnp.asarray(
            np.stack([np.concatenate([src, dst]), np.concatenate([dst, src])]),
            dtype=jnp.int32,
        )

    # Case 1: small graph -> fully fused single pallas_call (VMEM-resident).
    N1, H1 = 200, 96
    x1 = jax.random.normal(k_x1, (N1, H1), jnp.float32)
    p1 = init_params(k_p1, H1)
    a1 = gcn_norm_dense(ring_edges(N1), N1)
    out1 = jax.block_until_ready(gmlp_layer_pallas(x1, a1, p1))
    ref1 = jax.block_until_ready(gmlp_layer_ref(x1, a1, p1))
    np.testing.assert_allclose(np.asarray(out1), np.asarray(ref1), rtol=2e-2, atol=2e-2)

    # Case 2: exercise the two-stage streaming path (row-tiled + K-accumulation).
    N2, H2 = 520, 96
    x2 = jax.random.normal(k_x2, (N2, H2), jnp.float32)
    p2 = init_params(k_p2, H2)
    a2 = gcn_norm_dense(ring_edges(N2), N2)
    out2 = jax.block_until_ready(gmlp_layer_pallas(x2, a2, p2, force_two_stage=True))
    ref2 = jax.block_until_ready(gmlp_layer_ref(x2, a2, p2))
    np.testing.assert_allclose(np.asarray(out2), np.asarray(ref2), rtol=2e-2, atol=2e-2)

    print("KERNEL_OK")
</pallas_src>

<mosaic_0001>
module attributes {stable_mosaic.version = 11 : i64} {
  func.func @_fused_kernel(%arg0: i32, %arg1: memref<256x128xf32, #tpu.memory_space<vmem>>, %arg2: memref<256x256xbf16, #tpu.memory_space<vmem>>, %arg3: memref<8x128xf32, #tpu.memory_space<vmem>>, %arg4: memref<128x128xbf16, #tpu.memory_space<vmem>>, %arg5: memref<128x128xbf16, #tpu.memory_space<vmem>>, %arg6: memref<128x128xbf16, #tpu.memory_space<vmem>>, %arg7: memref<256x128xf32, #tpu.memory_space<vmem>>) attributes {dimension_semantics = [#tpu.dimension_semantics<arbitrary>], iteration_bounds = array<i64: 1>, scalar_prefetch = 0 : i64, scratch_operands = 0 : i64, tpu.core_type = #tpu.core_type<tc>, window_params = [{pipeline_mode = #tpu.pipeline_mode<synchronous>, transform_indices = @transform_0, window_bounds = array<i64: 256, 128>}, {pipeline_mode = #tpu.pipeline_mode<synchronous>, transform_indices = @transform_1, window_bounds = array<i64: 256, 256>}, {pipeline_mode = #tpu.pipeline_mode<synchronous>, transform_indices = @transform_2, window_bounds = array<i64: 8, 128>}, {pipeline_mode = #tpu.pipeline_mode<synchronous>, transform_indices = @transform_3, window_bounds = array<i64: 128, 128>}, {pipeline_mode = #tpu.pipeline_mode<synchronous>, transform_indices = @transform_4, window_bounds = array<i64: 128, 128>}, {pipeline_mode = #tpu.pipeline_mode<synchronous>, transform_indices = @transform_5, window_bounds = array<i64: 128, 128>}, {pipeline_mode = #tpu.pipeline_mode<synchronous>, transform_indices = @transform_6, window_bounds = array<i64: 256, 128>}]} {
    %0 = tpu.iota {dimensions = array<i32: 1>} : vector<1x128xi32>
    %c96_i32 = arith.constant 96 : i32
    %1 = vector.broadcast %c96_i32 : i32 to vector<1x128xi32>
    %2 = arith.cmpi slt, %0, %1 : vector<1x128xi32>
    %3 = arith.extui %2 : vector<1x128xi1> to vector<1x128xi32>
    %4 = arith.sitofp %3 : vector<1x128xi32> to vector<1x128xf32>
    %c0 = arith.constant 0 : index
    %c0_0 = arith.constant 0 : index
    %5 = vector.load %arg3[%c0, %c0_0] : memref<8x128xf32, #tpu.memory_space<vmem>>, vector<8x128xf32>
    %6 = vector.extract_strided_slice %5 {offsets = [0, 0], sizes = [1, 128], strides = [1, 1]} : vector<8x128xf32> to vector<1x128xf32>
    %7 = vector.extract_strided_slice %5 {offsets = [1, 0], sizes = [1, 128], strides = [1, 1]} : vector<8x128xf32> to vector<1x128xf32>
    %8 = vector.extract_strided_slice %5 {offsets = [2, 0], sizes = [1, 128], strides = [1, 1]} : vector<8x128xf32> to vector<1x128xf32>
    %9 = vector.extract_strided_slice %5 {offsets = [3, 0], sizes = [1, 128], strides = [1, 1]} : vector<8x128xf32> to vector<1x128xf32>
    %10 = vector.extract_strided_slice %5 {offsets = [4, 0], sizes = [1, 128], strides = [1, 1]} : vector<8x128xf32> to vector<1x128xf32>
    %11 = vector.extract_strided_slice %5 {offsets = [5, 0], sizes = [1, 128], strides = [1, 1]} : vector<8x128xf32> to vector<1x128xf32>
    %12 = vector.extract_strided_slice %5 {offsets = [6, 0], sizes = [1, 128], strides = [1, 1]} : vector<8x128xf32> to vector<1x128xf32>
    %c0_1 = arith.constant 0 : index
    %c0_2 = arith.constant 0 : index
    %13 = vector.load %arg1[%c0_1, %c0_2] : memref<256x128xf32, #tpu.memory_space<vmem>>, vector<256x128xf32>
    %cst = arith.constant dense<0.000000e+00> : vector<256xf32>
    %14 = vector.multi_reduction <add>, %13, %cst [1] : vector<256x128xf32> to vector<256xf32>
    %15 = vector.shape_cast %14 : vector<256xf32> to vector<256x1xf32>
    %cst_3 = arith.constant 0.010416667 : f32
    %16 = vector.broadcast %cst_3 : f32 to vector<256x1xf32>
    %17 = arith.mulf %15, %16 : vector<256x1xf32>
    %18 = vector.broadcast %17 : vector<256x1xf32> to vector<256x128xf32>
    %19 = arith.subf %13, %18 : vector<256x128xf32>
    %20 = vector.broadcast %4 : vector<1x128xf32> to vector<256x128xf32>
    %21 = arith.mulf %19, %20 : vector<256x128xf32>
    %22 = arith.mulf %21, %21 : vector<256x128xf32>
    %cst_4 = arith.constant dense<0.000000e+00> : vector<256xf32>
    %23 = vector.multi_reduction <add>, %22, %cst_4 [1] : vector<256x128xf32> to vector<256xf32>
    %24 = vector.shape_cast %23 : vector<256xf32> to vector<256x1xf32>
    %cst_5 = arith.constant 0.010416667 : f32
    %25 = vector.broadcast %cst_5 : f32 to vector<256x1xf32>
    %26 = arith.mulf %24, %25 : vector<256x1xf32>
    %cst_6 = arith.constant 9.99999974E-6 : f32
    %27 = vector.broadcast %cst_6 : f32 to vector<256x1xf32>
    %28 = arith.addf %26, %27 : vector<256x1xf32>
    %29 = math.rsqrt %28 : vector<256x1xf32>
    %30 = vector.broadcast %29 : vector<256x1xf32> to vector<256x128xf32>
    %31 = arith.mulf %21, %30 : vector<256x128xf32>
    %32 = vector.broadcast %6 : vector<1x128xf32> to vector<256x128xf32>
    %33 = arith.mulf %31, %32 : vector<256x128xf32>
    %34 = vector.broadcast %7 : vector<1x128xf32> to vector<256x128xf32>
    %35 = arith.addf %33, %34 : vector<256x128xf32>
    %36 = arith.truncf %35 : vector<256x128xf32> to vector<256x128xbf16>
    %c0_7 = arith.constant 0 : index
    %c0_8 = arith.constant 0 : index
    %37 = vector.load %arg4[%c0_7, %c0_8] : memref<128x128xbf16, #tpu.memory_space<vmem>>, vector<128x128xbf16>
    %cst_9 = arith.constant dense<0.000000e+00> : vector<256x128xf32>
    %38 = tpu.matmul %36, %37, %cst_9 {dimension_numbers = #tpu.dot_dimension_numbers<[1], [0], [0], [1], [0, 0, 1, 1], [], []>} : vector<256x128xbf16>, vector<128x128xbf16>, vector<256x128xf32> -> vector<256x128xf32>
    %39 = vector.broadcast %8 : vector<1x128xf32> to vector<256x128xf32>
    %40 = arith.addf %38, %39 : vector<256x128xf32>
    %cst_10 = arith.constant 5.000000e-01 : f32
    %41 = vector.broadcast %cst_10 : f32 to vector<256x128xf32>
    %42 = arith.mulf %41, %40 : vector<256x128xf32>
    %cst_11 = arith.constant 0.707106769 : f32
    %43 = vector.broadcast %cst_11 : f32 to vector<256x128xf32>
    %44 = arith.mulf %40, %43 : vector<256x128xf32>
    %45 = math.erf %44 : vector<256x128xf32>
    %cst_12 = arith.constant 1.000000e+00 : f32
    %46 = vector.broadcast %cst_12 : f32 to vector<256x128xf32>
    %47 = arith.addf %46, %45 : vector<256x128xf32>
    %48 = arith.mulf %42, %47 : vector<256x128xf32>
    %cst_13 = arith.constant dense<0.000000e+00> : vector<256xf32>
    %49 = vector.multi_reduction <add>, %48, %cst_13 [1] : vector<256x128xf32> to vector<256xf32>
    %50 = vector.shape_cast %49 : vector<256xf32> to vector<256x1xf32>
    %cst_14 = arith.constant 0.010416667 : f32
    %51 = vector.broadcast %cst_14 : f32 to vector<256x1xf32>
    %52 = arith.mulf %50, %51 : vector<256x1xf32>
    %53 = vector.broadcast %52 : vector<256x1xf32> to vector<256x128xf32>
    %54 = arith.subf %48, %53 : vector<256x128xf32>
    %55 = vector.broadcast %4 : vector<1x128xf32> to vector<256x128xf32>
    %56 = arith.mulf %54, %55 : vector<256x128xf32>
    %57 = arith.mulf %56, %56 : vector<256x128xf32>
    %cst_15 = arith.constant dense<0.000000e+00> : vector<256xf32>
    %58 = vector.multi_reduction <add>, %57, %cst_15 [1] : vector<256x128xf32> to vector<256xf32>
    %59 = vector.shape_cast %58 : vector<256xf32> to vector<256x1xf32>
    %cst_16 = arith.constant 0.010416667 : f32
    %60 = vector.broadcast %cst_16 : f32 to vector<256x1xf32>
    %61 = arith.mulf %59, %60 : vector<256x1xf32>
    %cst_17 = arith.constant 9.99999974E-6 : f32
    %62 = vector.broadcast %cst_17 : f32 to vector<256x1xf32>
    %63 = arith.addf %61, %62 : vector<256x1xf32>
    %64 = math.rsqrt %63 : vector<256x1xf32>
    %65 = vector.broadcast %64 : vector<256x1xf32> to vector<256x128xf32>
    %66 = arith.mulf %56, %65 : vector<256x128xf32>
    %67 = vector.broadcast %9 : vector<1x128xf32> to vector<256x128xf32>
    %68 = arith.mulf %66, %67 : vector<256x128xf32>
    %69 = vector.broadcast %10 : vector<1x128xf32> to vector<256x128xf32>
    %70 = arith.addf %68, %69 : vector<256x128xf32>
    %71 = arith.truncf %70 : vector<256x128xf32> to vector<256x128xbf16>
    %c0_18 = arith.constant 0 : index
    %c0_19 = arith.constant 0 : index
    %72 = vector.load %arg5[%c0_18, %c0_19] : memref<128x128xbf16, #tpu.memory_space<vmem>>, vector<128x128xbf16>
    %cst_20 = arith.constant dense<0.000000e+00> : vector<256x128xf32>
    %73 = tpu.matmul %71, %72, %cst_20 {dimension_numbers = #tpu.dot_dimension_numbers<[1], [0], [0], [1], [0, 0, 1, 1], [], []>} : vector<256x128xbf16>, vector<128x128xbf16>, vector<256x128xf32> -> vector<256x128xf32>
    %c0_21 = arith.constant 0 : index
    %c0_22 = arith.constant 0 : index
    %74 = vector.load %arg2[%c0_21, %c0_22] : memref<256x256xbf16, #tpu.memory_space<vmem>>, vector<256x256xbf16>
    %75 = arith.truncf %73 : vector<256x128xf32> to vector<256x128xbf16>
    %cst_23 = arith.constant dense<0.000000e+00> : vector<256x128xf32>
    %76 = tpu.matmul %74, %75, %cst_23 {dimension_numbers = #tpu.dot_dimension_numbers<[1], [0], [0], [1], [0, 0, 1, 1], [], []>} : vector<256x256xbf16>, vector<256x128xbf16>, vector<256x128xf32> -> vector<256x128xf32>
    %77 = vector.broadcast %11 : vector<1x128xf32> to vector<256x128xf32>
    %78 = arith.addf %76, %77 : vector<256x128xf32>
    %79 = math.tanh %78 : vector<256x128xf32>
    %80 = arith.mulf %79, %48 : vector<256x128xf32>
    %81 = arith.truncf %80 : vector<256x128xf32> to vector<256x128xbf16>
    %c0_24 = arith.constant 0 : index
    %c0_25 = arith.constant 0 : index
    %82 = vector.load %arg6[%c0_24, %c0_25] : memref<128x128xbf16, #tpu.memory_space<vmem>>, vector<128x128xbf16>
    %cst_26 = arith.constant dense<0.000000e+00> : vector<256x128xf32>
    %83 = tpu.matmul %81, %82, %cst_26 {dimension_numbers = #tpu.dot_dimension_numbers<[1], [0], [0], [1], [0, 0, 1, 1], [], []>} : vector<256x128xbf16>, vector<128x128xbf16>, vector<256x128xf32> -> vector<256x128xf32>
    %84 = vector.broadcast %12 : vector<1x128xf32> to vector<256x128xf32>
    %85 = arith.addf %83, %84 : vector<256x128xf32>
    %c0_27 = arith.constant 0 : index
    %c0_28 = arith.constant 0 : index
    %86 = vector.load %arg7[%c0_27, %c0_28] : memref<256x128xf32, #tpu.memory_space<vmem>>, vector<256x128xf32>
    tpu.vector_store %arg7[%c0_27, %c0_28], %85 {strides = array<i32>} : memref<256x128xf32, #tpu.memory_space<vmem>>, vector<256x128xf32>,
    return
  }
  func.func @transform_0(%arg0: i32) -> (i32, i32) {
    %c0_i32 = arith.constant 0 : i32
    %c0_i32_0 = arith.constant 0 : i32
    %c0_i32_1 = arith.constant 0 : i32
    return %c0_i32, %c0_i32_0 : i32, i32
  }
  func.func @transform_1(%arg0: i32) -> (i32, i32) {
    %c0_i32 = arith.constant 0 : i32
    %c0_i32_0 = arith.constant 0 : i32
    %c0_i32_1 = arith.constant 0 : i32
    return %c0_i32, %c0_i32_0 : i32, i32
  }
  func.func @transform_2(%arg0: i32) -> (i32, i32) {
    %c0_i32 = arith.constant 0 : i32
    %c0_i32_0 = arith.constant 0 : i32
    %c0_i32_1 = arith.constant 0 : i32
    return %c0_i32, %c0_i32_0 : i32, i32
  }
  func.func @transform_3(%arg0: i32) -> (i32, i32) {
    %c0_i32 = arith.constant 0 : i32
    %c0_i32_0 = arith.constant 0 : i32
    %c0_i32_1 = arith.constant 0 : i32
    return %c0_i32, %c0_i32_0 : i32, i32
  }
  func.func @transform_4(%arg0: i32) -> (i32, i32) {
    %c0_i32 = arith.constant 0 : i32
    %c0_i32_0 = arith.constant 0 : i32
    %c0_i32_1 = arith.constant 0 : i32
    return %c0_i32, %c0_i32_0 : i32, i32
  }
  func.func @transform_5(%arg0: i32) -> (i32, i32) {
    %c0_i32 = arith.constant 0 : i32
    %c0_i32_0 = arith.constant 0 : i32
    %c0_i32_1 = arith.constant 0 : i32
    return %c0_i32, %c0_i32_0 : i32, i32
  }
  func.func @transform_6(%arg0: i32) -> (i32, i32) {
    %c0_i32 = arith.constant 0 : i32
    %c0_i32_0 = arith.constant 0 : i32
    %c0_i32_1 = arith.constant 0 : i32
    return %c0_i32, %c0_i32_0 : i32, i32
  }
}

</mosaic_0001>

<llo_original>
// kernel: tpu_custom_call.1
$region0: #{tpu_custom_call.1}
  #allocation0 [shape = 'u32[]', space=smem, size = 0x4, offset = 0x4, fixed_abs, tag = 'smem constant byte address 0x4 - core index']
  #allocation1 [shape = 'u32[144,128]{1,0:T(1,128)}', space=vmem, size = 0x12000, scoped, tag = 'internal scratch']
  %s0 = inlined_call_operand.hbm [shape: f32[256,128], index: 0, kind: input, shape index: {}]
  %s1 = inlined_call_operand.hbm [shape: bf16[256,256], index: 1, kind: input, shape index: {}]
  %s2 = inlined_call_operand.hbm [shape: f32[8,128], index: 2, kind: input, shape index: {}]
  %s3 = inlined_call_operand.hbm [shape: bf16[128,128], index: 3, kind: input, shape index: {}]
  %s4 = inlined_call_operand.hbm [shape: bf16[128,128], index: 4, kind: input, shape index: {}]
  %s5 = inlined_call_operand.hbm [shape: bf16[128,128], index: 5, kind: input, shape index: {}]
  %s6 = inlined_call_operand.hbm [shape: f32[256,128], index: 6, kind: output, shape index: {}]
  %s7 = sld [smem:[#allocation0]]
  $region58: #{tpu_custom_call.1} parent=0
    _
  %s9 = ssub.s32 1, %s7
  %s10 = scalar_select 0, %s9, %s7
  $region1: #{tpu_custom_call.1} parent=0
    #allocation2 [shape = 'u8[131072]{0}', space=vmem, size = 0x20000, scoped, tag = 'input window, operand 0, single buffered']
    #allocation3 [shape = 's32[1]{0}', space=sflag, size = 0x4, scoped, tag = 'scoped memory for tpu_custom_call.1']
    #allocation4 [shape = 's32[1]{0}', space=sflag, size = 0x4, scoped, tag = 'scoped memory for tpu_custom_call.1']
    #allocation5 [shape = 'u8[131072]{0}', space=vmem, size = 0x20000, scoped, tag = 'input window, operand 1, single buffered']
    #allocation6 [shape = 's32[1]{0}', space=sflag, size = 0x4, scoped, tag = 'scoped memory for tpu_custom_call.1']
    #allocation7 [shape = 'u8[4096]{0}', space=vmem, size = 0x1000, scoped, tag = 'input window, operand 2, single buffered']
    #allocation8 [shape = 'u8[32768]{0}', space=vmem, size = 0x8000, scoped, tag = 'input window, operand 3, single buffered']
    #allocation9 [shape = 's32[1]{0}', space=sflag, size = 0x4, scoped, tag = 'scoped memory for tpu_custom_call.1']
    #allocation10 [shape = 'u8[32768]{0}', space=vmem, size = 0x8000, scoped, tag = 'input window, operand 4, single buffered']
    #allocation11 [shape = 'u8[32768]{0}', space=vmem, size = 0x8000, scoped, tag = 'input window, operand 5, single buffered']
    #allocation12 [shape = 's32[1]{0}', space=sflag, size = 0x4, scoped, tag = 'scoped memory for tpu_custom_call.1']
    #allocation13 [shape = 'u8[131072]{0}', space=vmem, size = 0x20000, scoped, tag = 'output window, operand 0, single buffered']
    %11 = vsyncpa [#allocation3], 0
    %12 = vsyncpa [#allocation6], 0
    %13 = vsyncpa [#allocation9], 0
    %14 = vsyncpa [#allocation12], 0
    %15 = vsyncpa [#allocation4], 0
    // Predicated region
    $region2: #{tpu_custom_call.1} parent=1 // pred_check
      _
    $region3: #{tpu_custom_call.1} parent=1 // pred_check_branch
      %17 = sbr.rel (0) target = $region5
    $region4: #{tpu_custom_call.1} parent=1 // pred_region
      %s19 = ssub.s32 4096, 4096
      %20 = vsyncadd [#allocation3], %s19
      %s21 = sshll.u32 [#allocation2], 4
      %s22 = int_to_ptr.vmem [resolvable:$true] %s21
      %27 = dma.hbm_to_vmem [thread:$0]  %s0, 4096, %s22, [#allocation3], 128, 128, 8
    $region5: #{tpu_custom_call.1} parent=1 // pred_fallthru
      _
    // Predicated region
    $region6: #{tpu_custom_call.1} parent=1 // pred_check
      _
    $region7: #{tpu_custom_call.1} parent=1 // pred_check_branch
      %29 = sbr.rel (0) target = $region9
    $region8: #{tpu_custom_call.1} parent=1 // pred_region
      %s31 = ssub.s32 4096, 4096
      %32 = vsyncadd [#allocation6], %s31
      %s33 = sshll.u32 [#allocation5], 4
      %s34 = int_to_ptr.vmem [resolvable:$true] %s33
      %39 = dma.hbm_to_vmem [thread:$0]  %s1, 4096, %s34, [#allocation6], 128, 128, 8
    $region9: #{tpu_custom_call.1} parent=1 // pred_fallthru
      _
    // Predicated region
    $region10: #{tpu_custom_call.1} parent=1 // pred_check
      _
    $region11: #{tpu_custom_call.1} parent=1 // pred_check_branch
      %41 = sbr.rel (0) target = $region13
    $region12: #{tpu_custom_call.1} parent=1 // pred_region
      %s43 = ssub.s32 128, 128
      %44 = vsyncadd [#allocation6], %s43
      %s46 = sshll.u32 [#allocation7], 4
      %s47 = int_to_ptr.vmem [resolvable:$true] %s46
      %49 = dma.hbm_to_vmem [thread:$0]  %s2, 128, %s47, [#allocation6]
    $region13: #{tpu_custom_call.1} parent=1 // pred_fallthru
      _
    // Predicated region
    $region14: #{tpu_custom_call.1} parent=1 // pred_check
      _
    $region15: #{tpu_custom_call.1} parent=1 // pred_check_branch
      %51 = sbr.rel (0) target = $region17
    $region16: #{tpu_custom_call.1} parent=1 // pred_region
      %s53 = ssub.s32 1024, 1024
      %54 = vsyncadd [#allocation9], %s53
      %s55 = sshll.u32 [#allocation8], 4
      %s56 = int_to_ptr.vmem [resolvable:$true] %s55
      %61 = dma.hbm_to_vmem [thread:$0]  %s3, 1024, %s56, [#allocation9], 64, 64, 4
    $region17: #{tpu_custom_call.1} parent=1 // pred_fallthru
      _
    // Predicated region
    $region18: #{tpu_custom_call.1} parent=1 // pred_check
      _
    $region19: #{tpu_custom_call.1} parent=1 // pred_check_branch
      %63 = sbr.rel (0) target = $region21
    $region20: #{tpu_custom_call.1} parent=1 // pred_region
      %s65 = ssub.s32 1024, 1024
      %66 = vsyncadd [#allocation9], %s65
      %s67 = sshll.u32 [#allocation10], 4
      %s68 = int_to_ptr.vmem [resolvable:$true] %s67
      %73 = dma.hbm_to_vmem [thread:$0]  %s4, 1024, %s68, [#allocation9], 64, 64, 4
    $region21: #{tpu_custom_call.1} parent=1 // pred_fallthru
      _
    // Predicated region
    $region22: #{tpu_custom_call.1} parent=1 // pred_check
      _
    $region23: #{tpu_custom_call.1} parent=1 // pred_check_branch
      %75 = sbr.rel (0) target = $region25
    $region24: #{tpu_custom_call.1} parent=1 // pred_region
      %s77 = ssub.s32 1024, 1024
      %78 = vsyncadd [#allocation12], %s77
      %s79 = sshll.u32 [#allocation11], 4
      %s80 = int_to_ptr.vmem [resolvable:$true] %s79
      %85 = dma.hbm_to_vmem [thread:$0]  %s5, 1024, %s80, [#allocation12], 64, 64, 4
    $region25: #{tpu_custom_call.1} parent=1 // pred_fallthru
      _
    // Predicated region
    $region26: #{tpu_custom_call.1} parent=1 // pred_check
      _
    $region27: #{tpu_custom_call.1} parent=1 // pred_check_branch
      %87 = sbr.rel (0) target = $region29
    $region28: #{tpu_custom_call.1} parent=1 // pred_region
      %88 = dma.done [#allocation3], 4096
    $region29: #{tpu_custom_call.1} parent=1 // pred_fallthru
      _
    // Predicated region
    $region30: #{tpu_custom_call.1} parent=1 // pred_check
      _
    $region31: #{tpu_custom_call.1} parent=1 // pred_check_branch
      %90 = sbr.rel (0) target = $region33
    $region32: #{tpu_custom_call.1} parent=1 // pred_region
      %91 = dma.done [#allocation6], 4096
    $region33: #{tpu_custom_call.1} parent=1 // pred_fallthru
      _
    // Predicated region
    $region34: #{tpu_custom_call.1} parent=1 // pred_check
      _
    $region35: #{tpu_custom_call.1} parent=1 // pred_check_branch
      %93 = sbr.rel (0) target = $region37
    $region36: #{tpu_custom_call.1} parent=1 // pred_region
      %94 = dma.done [#allocation6], 128
    $region37: #{tpu_custom_call.1} parent=1 // pred_fallthru
      _
    // Predicated region
    $region38: #{tpu_custom_call.1} parent=1 // pred_check
      _
    $region39: #{tpu_custom_call.1} parent=1 // pred_check_branch
      %96 = sbr.rel (0) target = $region41
    $region40: #{tpu_custom_call.1} parent=1 // pred_region
      %97 = dma.done [#allocation9], 1024
    $region41: #{tpu_custom_call.1} parent=1 // pred_fallthru
      _
    // Predicated region
    $region42: #{tpu_custom_call.1} parent=1 // pred_check
      _
    $region43: #{tpu_custom_call.1} parent=1 // pred_check_branch
      %99 = sbr.rel (0) target = $region45
    $region44: #{tpu_custom_call.1} parent=1 // pred_region
      %100 = dma.done [#allocation9], 1024
    $region45: #{tpu_custom_call.1} parent=1 // pred_fallthru
      _
    // Predicated region
    $region46: #{tpu_custom_call.1} parent=1 // pred_check
      _
    $region47: #{tpu_custom_call.1} parent=1 // pred_check_branch
      %102 = sbr.rel (0) target = $region49
    $region48: #{tpu_custom_call.1} parent=1 // pred_region
      %103 = dma.done [#allocation12], 1024
    $region49: #{tpu_custom_call.1} parent=1 // pred_fallthru
      _
    %v105 = vlaneseq
    %v106 = vand.u32 %v105, 127
    %vm107 = vcmp.lt.s32.totalorder %v106, 96
    %v108 = vsel %vm107, 1, 0
    %v109 = vcvt.s32.f32 %v108
    %v110 = vld [vmem:[#allocation7] sm:$0xff]
    %v111 = vld [vmem:[#allocation2] sm:$0xff]
    %v112 = vld [vmem:[#allocation2 + $0x8] sm:$0xff]
    %v113 = vld [vmem:[#allocation2 + $0x10] sm:$0xff]
    %v114 = vld [vmem:[#allocation2 + $0x18] sm:$0xff]
    %v115 = vld [vmem:[#allocation2 + $0x20] sm:$0xff]
    %v116 = vld [vmem:[#allocation2 + $0x28] sm:$0xff]
    %v117 = vld [vmem:[#allocation2 + $0x30] sm:$0xff]
    %v118 = vld [vmem:[#allocation2 + $0x38] sm:$0xff]
    %v119 = vld [vmem:[#allocation2 + $0x40] sm:$0xff]
    %v120 = vld [vmem:[#allocation2 + $0x48] sm:$0xff]
    %v121 = vld [vmem:[#allocation2 + $0x50] sm:$0xff]
    %v122 = vld [vmem:[#allocation2 + $0x58] sm:$0xff]
    %v123 = vld [vmem:[#allocation2 + $0x60] sm:$0xff]
    %v124 = vld [vmem:[#allocation2 + $0x68] sm:$0xff]
    %v125 = vld [vmem:[#allocation2 + $0x70] sm:$0xff]
    %v126 = vld [vmem:[#allocation2 + $0x78] sm:$0xff]
    %v127 = vld [vmem:[#allocation2 + $0x80] sm:$0xff]
    %v128 = vld [vmem:[#allocation2 + $0x88] sm:$0xff]
    %v129 = vld [vmem:[#allocation2 + $0x90] sm:$0xff]
    %v130 = vld [vmem:[#allocation2 + $0x98] sm:$0xff]
    %v131 = vld [vmem:[#allocation2 + $0xa0] sm:$0xff]
    %v132 = vld [vmem:[#allocation2 + $0xa8] sm:$0xff]
    %v133 = vld [vmem:[#allocation2 + $0xb0] sm:$0xff]
    %v134 = vld [vmem:[#allocation2 + $0xb8] sm:$0xff]
    %v135 = vld [vmem:[#allocation2 + $0xc0] sm:$0xff]
    %v136 = vld [vmem:[#allocation2 + $0xc8] sm:$0xff]
    %v137 = vld [vmem:[#allocation2 + $0xd0] sm:$0xff]
    %v138 = vld [vmem:[#allocation2 + $0xd8] sm:$0xff]
    %v139 = vld [vmem:[#allocation2 + $0xe0] sm:$0xff]
    %v140 = vld [vmem:[#allocation2 + $0xe8] sm:$0xff]
    %v141 = vld [vmem:[#allocation2 + $0xf0] sm:$0xff]
    %v142 = vld [vmem:[#allocation2 + $0xf8] sm:$0xff]
    %143 = vadd.xlane.f32.xlu0 %v111
    %v144 = vpop.xlane.xlu0 %143
    %145 = vadd.xlane.f32.xlu0 %v112
    %v146 = vpop.xlane.xlu0 %145
    %147 = vadd.xlane.f32.xlu0 %v113
    %v148 = vpop.xlane.xlu0 %147
    %149 = vadd.xlane.f32.xlu0 %v114
    %v150 = vpop.xlane.xlu0 %149
    %151 = vadd.xlane.f32.xlu0 %v115
    %v152 = vpop.xlane.xlu0 %151
    %153 = vadd.xlane.f32.xlu0 %v116
    %v154 = vpop.xlane.xlu0 %153
    %155 = vadd.xlane.f32.xlu0 %v117
    %v156 = vpop.xlane.xlu0 %155
    %157 = vadd.xlane.f32.xlu0 %v118
    %v158 = vpop.xlane.xlu0 %157
    %159 = vadd.xlane.f32.xlu0 %v119
    %v160 = vpop.xlane.xlu0 %159
    %161 = vadd.xlane.f32.xlu0 %v120
    %v162 = vpop.xlane.xlu0 %161
    %163 = vadd.xlane.f32.xlu0 %v121
    %v164 = vpop.xlane.xlu0 %163
    %165 = vadd.xlane.f32.xlu0 %v122
    %v166 = vpop.xlane.xlu0 %165
    %167 = vadd.xlane.f32.xlu0 %v123
    %v168 = vpop.xlane.xlu0 %167
    %169 = vadd.xlane.f32.xlu0 %v124
    %v170 = vpop.xlane.xlu0 %169
    %171 = vadd.xlane.f32.xlu0 %v125
    %v172 = vpop.xlane.xlu0 %171
    %173 = vadd.xlane.f32.xlu0 %v126
    %v174 = vpop.xlane.xlu0 %173
    %175 = vadd.xlane.f32.xlu0 %v127
    %v176 = vpop.xlane.xlu0 %175
    %177 = vadd.xlane.f32.xlu0 %v128
    %v178 = vpop.xlane.xlu0 %177
    %179 = vadd.xlane.f32.xlu0 %v129
    %v180 = vpop.xlane.xlu0 %179
    %181 = vadd.xlane.f32.xlu0 %v130
    %v182 = vpop.xlane.xlu0 %181
    %183 = vadd.xlane.f32.xlu0 %v131
    %v184 = vpop.xlane.xlu0 %183
    %185 = vadd.xlane.f32.xlu0 %v132
    %v186 = vpop.xlane.xlu0 %185
    %187 = vadd.xlane.f32.xlu0 %v133
    %v188 = vpop.xlane.xlu0 %187
    %189 = vadd.xlane.f32.xlu0 %v134
    %v190 = vpop.xlane.xlu0 %189
    %191 = vadd.xlane.f32.xlu0 %v135
    %v192 = vpop.xlane.xlu0 %191
    %193 = vadd.xlane.f32.xlu0 %v136
    %v194 = vpop.xlane.xlu0 %193
    %195 = vadd.xlane.f32.xlu0 %v137
    %v196 = vpop.xlane.xlu0 %195
    %197 = vadd.xlane.f32.xlu0 %v138
    %v198 = vpop.xlane.xlu0 %197
    %199 = vadd.xlane.f32.xlu0 %v139
    %v200 = vpop.xlane.xlu0 %199
    %201 = vadd.xlane.f32.xlu0 %v140
    %v202 = vpop.xlane.xlu0 %201
    %203 = vadd.xlane.f32.xlu0 %v141
    %v204 = vpop.xlane.xlu0 %203
    %205 = vadd.xlane.f32.xlu0 %v142
    %v206 = vpop.xlane.xlu0 %205
    %v207 = vmul.f32 %v144, 0.010416667
    %v208 = vmul.f32 %v146, 0.010416667
    %v209 = vmul.f32 %v148, 0.010416667
    %v210 = vmul.f32 %v150, 0.010416667
    %v211 = vmul.f32 %v152, 0.010416667
    %v212 = vmul.f32 %v154, 0.010416667
    %v213 = vmul.f32 %v156, 0.010416667
    %v214 = vmul.f32 %v158, 0.010416667
    %v215 = vmul.f32 %v160, 0.010416667
    %v216 = vmul.f32 %v162, 0.010416667
    %v217 = vmul.f32 %v164, 0.010416667
    %v218 = vmul.f32 %v166, 0.010416667
    %v219 = vmul.f32 %v168, 0.010416667
    %v220 = vmul.f32 %v170, 0.010416667
    %v221 = vmul.f32 %v172, 0.010416667
    %v222 = vmul.f32 %v174, 0.010416667
    %v223 = vmul.f32 %v176, 0.010416667
    %v224 = vmul.f32 %v178, 0.010416667
    %v225 = vmul.f32 %v180, 0.010416667
    %v226 = vmul.f32 %v182, 0.010416667
    %v227 = vmul.f32 %v184, 0.010416667
    %v228 = vmul.f32 %v186, 0.010416667
    %v229 = vmul.f32 %v188, 0.010416667
    %v230 = vmul.f32 %v190, 0.010416667
    %v231 = vmul.f32 %v192, 0.010416667
    %v232 = vmul.f32 %v194, 0.010416667
    %v233 = vmul.f32 %v196, 0.010416667
    %v234 = vmul.f32 %v198, 0.010416667
    %v235 = vmul.f32 %v200, 0.010416667
    %v236 = vmul.f32 %v202, 0.010416667
    %v237 = vmul.f32 %v204, 0.010416667
    %v238 = vmul.f32 %v206, 0.010416667
    %v239 = vsub.f32 %v111, %v207
    %v240 = vsub.f32 %v112, %v208
    %v241 = vsub.f32 %v113, %v209
    %v242 = vsub.f32 %v114, %v210
    %v243 = vsub.f32 %v115, %v211
    %v244 = vsub.f32 %v116, %v212
    %v245 = vsub.f32 %v117, %v213
    %v246 = vsub.f32 %v118, %v214
    %v247 = vsub.f32 %v119, %v215
    %v248 = vsub.f32 %v120, %v216
    %v249 = vsub.f32 %v121, %v217
    %v250 = vsub.f32 %v122, %v218
    %v251 = vsub.f32 %v123, %v219
    %v252 = vsub.f32 %v124, %v220
    %v253 = vsub.f32 %v125, %v221
    %v254 = vsub.f32 %v126, %v222
    %v255 = vsub.f32 %v127, %v223
    %v256 = vsub.f32 %v128, %v224
    %v257 = vsub.f32 %v129, %v225
    %v258 = vsub.f32 %v130, %v226
    %v259 = vsub.f32 %v131, %v227
    %v260 = vsub.f32 %v132, %v228
    %v261 = vsub.f32 %v133, %v229
    %v262 = vsub.f32 %v134, %v230
    %v263 = vsub.f32 %v135, %v231
    %v264 = vsub.f32 %v136, %v232
    %v265 = vsub.f32 %v137, %v233
    %v266 = vsub.f32 %v138, %v234
    %v267 = vsub.f32 %v139, %v235
    %v268 = vsub.f32 %v140, %v236
    %v269 = vsub.f32 %v141, %v237
    %v270 = vsub.f32 %v142, %v238
    %v271 = vmul.f32 %v239, %v109
    %v272 = vmul.f32 %v240, %v109
    %v273 = vmul.f32 %v241, %v109
    %v274 = vmul.f32 %v242, %v109
    %v275 = vmul.f32 %v243, %v109
    %v276 = vmul.f32 %v244, %v109
    %v277 = vmul.f32 %v245, %v109
    %v278 = vmul.f32 %v246, %v109
    %v279 = vmul.f32 %v247, %v109
    %v280 = vmul.f32 %v248, %v109
    %v281 = vmul.f32 %v249, %v109
    %v282 = vmul.f32 %v250, %v109
    %v283 = vmul.f32 %v251, %v109
    %v284 = vmul.f32 %v252, %v109
    %v285 = vmul.f32 %v253, %v109
    %v286 = vmul.f32 %v254, %v109
    %v287 = vmul.f32 %v255, %v109
    %v288 = vmul.f32 %v256, %v109
    %v289 = vmul.f32 %v257, %v109
    %v290 = vmul.f32 %v258, %v109
    %v291 = vmul.f32 %v259, %v109
    %v292 = vmul.f32 %v260, %v109
    %v293 = vmul.f32 %v261, %v109
    %v294 = vmul.f32 %v262, %v109
    %v295 = vmul.f32 %v263, %v109
    %v296 = vmul.f32 %v264, %v109
    %v297 = vmul.f32 %v265, %v109
    %v298 = vmul.f32 %v266, %v109
    %v299 = vmul.f32 %v267, %v109
    %v300 = vmul.f32 %v268, %v109
    %v301 = vmul.f32 %v269, %v109
    %v302 = vmul.f32 %v270, %v109
    %v303 = vmul.f32 %v271, %v271
    %v304 = vmul.f32 %v272, %v272
    %v305 = vmul.f32 %v273, %v273
    %v306 = vmul.f32 %v274, %v274
    %v307 = vmul.f32 %v275, %v275
    %v308 = vmul.f32 %v276, %v276
    %v309 = vmul.f32 %v277, %v277
    %v310 = vmul.f32 %v278, %v278
    %v311 = vmul.f32 %v279, %v279
    %v312 = vmul.f32 %v280, %v280
    %v313 = vmul.f32 %v281, %v281
    %v314 = vmul.f32 %v282, %v282
    %v315 = vmul.f32 %v283, %v283
    %v316 = vmul.f32 %v284, %v284
    %v317 = vmul.f32 %v285, %v285
    %v318 = vmul.f32 %v286, %v286
    %v319 = vmul.f32 %v287, %v287
    %v320 = vmul.f32 %v288, %v288
    %v321 = vmul.f32 %v289, %v289
    %v322 = vmul.f32 %v290, %v290
    %v323 = vmul.f32 %v291, %v291
    %v324 = vmul.f32 %v292, %v292
    %v325 = vmul.f32 %v293, %v293
    %v326 = vmul.f32 %v294, %v294
    %v327 = vmul.f32 %v295, %v295
    %v328 = vmul.f32 %v296, %v296
    %v329 = vmul.f32 %v297, %v297
    %v330 = vmul.f32 %v298, %v298
    %v331 = vmul.f32 %v299, %v299
    %v332 = vmul.f32 %v300, %v300
    %v333 = vmul.f32 %v301, %v301
    %v334 = vmul.f32 %v302, %v302
    %335 = vadd.xlane.f32.xlu0 %v303
    %v336 = vpop.xlane.xlu0 %335
    %337 = vadd.xlane.f32.xlu0 %v304
    %v338 = vpop.xlane.xlu0 %337
    %339 = vadd.xlane.f32.xlu0 %v305
    %v340 = vpop.xlane.xlu0 %339
    %341 = vadd.xlane.f32.xlu0 %v306
    %v342 = vpop.xlane.xlu0 %341
    %343 = vadd.xlane.f32.xlu0 %v307
    %v344 = vpop.xlane.xlu0 %343
    %345 = vadd.xlane.f32.xlu0 %v308
    %v346 = vpop.xlane.xlu0 %345
    %347 = vadd.xlane.f32.xlu0 %v309
    %v348 = vpop.xlane.xlu0 %347
    %349 = vadd.xlane.f32.xlu0 %v310
    %v350 = vpop.xlane.xlu0 %349
    %351 = vadd.xlane.f32.xlu0 %v311
    %v352 = vpop.xlane.xlu0 %351
    %353 = vadd.xlane.f32.xlu0 %v312
    %v354 = vpop.xlane.xlu0 %353
    %355 = vadd.xlane.f32.xlu0 %v313
    %v356 = vpop.xlane.xlu0 %355
    %357 = vadd.xlane.f32.xlu0 %v314
    %v358 = vpop.xlane.xlu0 %357
    %359 = vadd.xlane.f32.xlu0 %v315
    %v360 = vpop.xlane.xlu0 %359
    %361 = vadd.xlane.f32.xlu0 %v316
    %v362 = vpop.xlane.xlu0 %361
    %363 = vadd.xlane.f32.xlu0 %v317
    %v364 = vpop.xlane.xlu0 %363
    %365 = vadd.xlane.f32.xlu0 %v318
    %v366 = vpop.xlane.xlu0 %365
    %367 = vadd.xlane.f32.xlu0 %v319
    %v368 = vpop.xlane.xlu0 %367
    %369 = vadd.xlane.f32.xlu0 %v320
    %v370 = vpop.xlane.xlu0 %369
    %371 = vadd.xlane.f32.xlu0 %v321
    %v372 = vpop.xlane.xlu0 %371
    %373 = vadd.xlane.f32.xlu0 %v322
    %v374 = vpop.xlane.xlu0 %373
    %375 = vadd.xlane.f32.xlu0 %v323
    %v376 = vpop.xlane.xlu0 %375
    %377 = vadd.xlane.f32.xlu0 %v324
    %v378 = vpop.xlane.xlu0 %377
    %379 = vadd.xlane.f32.xlu0 %v325
    %v380 = vpop.xlane.xlu0 %379
    %381 = vadd.xlane.f32.xlu0 %v326
    %v382 = vpop.xlane.xlu0 %381
    %383 = vadd.xlane.f32.xlu0 %v327
    %v384 = vpop.xlane.xlu0 %383
    %385 = vadd.xlane.f32.xlu0 %v328
    %v386 = vpop.xlane.xlu0 %385
    %387 = vadd.xlane.f32.xlu0 %v329
    %v388 = vpop.xlane.xlu0 %387
    %389 = vadd.xlane.f32.xlu0 %v330
    %v390 = vpop.xlane.xlu0 %389
    %391 = vadd.xlane.f32.xlu0 %v331
    %v392 = vpop.xlane.xlu0 %391
    %393 = vadd.xlane.f32.xlu0 %v332
    %v394 = vpop.xlane.xlu0 %393
    %395 = vadd.xlane.f32.xlu0 %v333
    %v396 = vpop.xlane.xlu0 %395
    %397 = vadd.xlane.f32.xlu0 %v334
    %v398 = vpop.xlane.xlu0 %397
    %v399 = vmul.f32 %v336, 0.010416667
    %v400 = vmul.f32 %v338, 0.010416667
    %v401 = vmul.f32 %v340, 0.010416667
    %v402 = vmul.f32 %v342, 0.010416667
    %v403 = vmul.f32 %v344, 0.010416667
    %v404 = vmul.f32 %v346, 0.010416667
    %v405 = vmul.f32 %v348, 0.010416667
    %v406 = vmul.f32 %v350, 0.010416667
    %v407 = vmul.f32 %v352, 0.010416667
    %v408 = vmul.f32 %v354, 0.010416667
    %v409 = vmul.f32 %v356, 0.010416667
    %v410 = vmul.f32 %v358, 0.010416667
    %v411 = vmul.f32 %v360, 0.010416667
    %v412 = vmul.f32 %v362, 0.010416667
    %v413 = vmul.f32 %v364, 0.010416667
    %v414 = vmul.f32 %v366, 0.010416667
    %v415 = vmul.f32 %v368, 0.010416667
    %v416 = vmul.f32 %v370, 0.010416667
    %v417 = vmul.f32 %v372, 0.010416667
    %v418 = vmul.f32 %v374, 0.010416667
    %v419 = vmul.f32 %v376, 0.010416667
    %v420 = vmul.f32 %v378, 0.010416667
    %v421 = vmul.f32 %v380, 0.010416667
    %v422 = vmul.f32 %v382, 0.010416667
    %v423 = vmul.f32 %v384, 0.010416667
    %v424 = vmul.f32 %v386, 0.010416667
    %v425 = vmul.f32 %v388, 0.010416667
    %v426 = vmul.f32 %v390, 0.010416667
    %v427 = vmul.f32 %v392, 0.010416667
    %v428 = vmul.f32 %v394, 0.010416667
    %v429 = vmul.f32 %v396, 0.010416667
    %v430 = vmul.f32 %v398, 0.010416667
    %v431 = vadd.f32 %v399, 1e-05
    %v432 = vadd.f32 %v400, 1e-05
    %v433 = vadd.f32 %v401, 1e-05
    %v434 = vadd.f32 %v402, 1e-05
    %v435 = vadd.f32 %v403, 1e-05
    %v436 = vadd.f32 %v404, 1e-05
    %v437 = vadd.f32 %v405, 1e-05
    %v438 = vadd.f32 %v406, 1e-05
    %v439 = vadd.f32 %v407, 1e-05
    %v440 = vadd.f32 %v408, 1e-05
    %v441 = vadd.f32 %v409, 1e-05
    %v442 = vadd.f32 %v410, 1e-05
    %v443 = vadd.f32 %v411, 1e-05
    %v444 = vadd.f32 %v412, 1e-05
    %v445 = vadd.f32 %v413, 1e-05
    %v446 = vadd.f32 %v414, 1e-05
    %v447 = vadd.f32 %v415, 1e-05
    %v448 = vadd.f32 %v416, 1e-05
    %v449 = vadd.f32 %v417, 1e-05
    %v450 = vadd.f32 %v418, 1e-05
    %v451 = vadd.f32 %v419, 1e-05
    %v452 = vadd.f32 %v420, 1e-05
    %v453 = vadd.f32 %v421, 1e-05
    %v454 = vadd.f32 %v422, 1e-05
    %v455 = vadd.f32 %v423, 1e-05
    %v456 = vadd.f32 %v424, 1e-05
    %v457 = vadd.f32 %v425, 1e-05
    %v458 = vadd.f32 %v426, 1e-05
    %v459 = vadd.f32 %v427, 1e-05
    %v460 = vadd.f32 %v428, 1e-05
    %v461 = vadd.f32 %v429, 1e-05
    %v462 = vadd.f32 %v430, 1e-05
    %v463 = vrsqrt.pop %v431
    %v464 = vrsqrt.pop %v432
    %v465 = vrsqrt.pop %v433
    %v466 = vrsqrt.pop %v434
    %v467 = vrsqrt.pop %v435
    %v468 = vrsqrt.pop %v436
    %v469 = vrsqrt.pop %v437
    %v470 = vrsqrt.pop %v438
    %v471 = vrsqrt.pop %v439
    %v472 = vrsqrt.pop %v440
    %v473 = vrsqrt.pop %v441
    %v474 = vrsqrt.pop %v442
    %v475 = vrsqrt.pop %v443
    %v476 = vrsqrt.pop %v444
    %v477 = vrsqrt.pop %v445
    %v478 = vrsqrt.pop %v446
    %v479 = vrsqrt.pop %v447
    %v480 = vrsqrt.pop %v448
    %v481 = vrsqrt.pop %v449
    %v482 = vrsqrt.pop %v450
    %v483 = vrsqrt.pop %v451
    %v484 = vrsqrt.pop %v452
    %v485 = vrsqrt.pop %v453
    %v486 = vrsqrt.pop %v454
    %v487 = vrsqrt.pop %v455
    %v488 = vrsqrt.pop %v456
    %v489 = vrsqrt.pop %v457
    %v490 = vrsqrt.pop %v458
    %v491 = vrsqrt.pop %v459
    %v492 = vrsqrt.pop %v460
    %v493 = vrsqrt.pop %v461
    %v494 = vrsqrt.pop %v462
    %v495 = vmul.f32 %v271, %v463
    %v496 = vmul.f32 %v272, %v464
    %v497 = vmul.f32 %v273, %v465
    %v498 = vmul.f32 %v274, %v466
    %v499 = vmul.f32 %v275, %v467
    %v500 = vmul.f32 %v276, %v468
    %v501 = vmul.f32 %v277, %v469
    %v502 = vmul.f32 %v278, %v470
    %v503 = vmul.f32 %v279, %v471
    %v504 = vmul.f32 %v280, %v472
    %v505 = vmul.f32 %v281, %v473
    %v506 = vmul.f32 %v282, %v474
    %v507 = vmul.f32 %v283, %v475
    %v508 = vmul.f32 %v284, %v476
    %v509 = vmul.f32 %v285, %v477
    %v510 = vmul.f32 %v286, %v478
    %v511 = vmul.f32 %v287, %v479
    %v512 = vmul.f32 %v288, %v480
    %v513 = vmul.f32 %v289, %v481
    %v514 = vmul.f32 %v290, %v482
    %v515 = vmul.f32 %v291, %v483
    %v516 = vmul.f32 %v292, %v484
    %v517 = vmul.f32 %v293, %v485
    %v518 = vmul.f32 %v294, %v486
    %v519 = vmul.f32 %v295, %v487
    %v520 = vmul.f32 %v296, %v488
    %v521 = vmul.f32 %v297, %v489
    %v522 = vmul.f32 %v298, %v490
    %v523 = vmul.f32 %v299, %v491
    %v524 = vmul.f32 %v300, %v492
    %v525 = vmul.f32 %v301, %v493
    %v526 = vmul.f32 %v302, %v494
    %v527 = vlaneseq
    %v528 = vshrl.u32 %v527, 7
    %v529 = vsub.s32 0, %v528
    %v530 = vrot.slane %v110, %v529
    %v531 = vmul.f32 %v495, %v530
    %v532 = vmul.f32 %v496, %v530
    %v533 = vmul.f32 %v497, %v530
    %v534 = vmul.f32 %v498, %v530
    %v535 = vmul.f32 %v499, %v530
    %v536 = vmul.f32 %v500, %v530
    %v537 = vmul.f32 %v501, %v530
    %v538 = vmul.f32 %v502, %v530
    %v539 = vmul.f32 %v503, %v530
    %v540 = vmul.f32 %v504, %v530
    %v541 = vmul.f32 %v505, %v530
    %v542 = vmul.f32 %v506, %v530
    %v543 = vmul.f32 %v507, %v530
    %v544 = vmul.f32 %v508, %v530
    %v545 = vmul.f32 %v509, %v530
    %v546 = vmul.f32 %v510, %v530
    %v547 = vmul.f32 %v511, %v530
    %v548 = vmul.f32 %v512, %v530
    %v549 = vmul.f32 %v513, %v530
    %v550 = vmul.f32 %v514, %v530
    %v551 = vmul.f32 %v515, %v530
    %v552 = vmul.f32 %v516, %v530
    %v553 = vmul.f32 %v517, %v530
    %v554 = vmul.f32 %v518, %v530
    %v555 = vmul.f32 %v519, %v530
    %v556 = vmul.f32 %v520, %v530
    %v557 = vmul.f32 %v521, %v530
    %v558 = vmul.f32 %v522, %v530
    %v559 = vmul.f32 %v523, %v530
    %v560 = vmul.f32 %v524, %v530
    %v561 = vmul.f32 %v525, %v530
    %v562 = vmul.f32 %v526, %v530
    %v563 = vlaneseq
    %v564 = vshrl.u32 %v563, 7
    %v565 = vsub.s32 1, %v564
    %v566 = vrot.slane %v110, %v565
    %v567 = vadd.f32 %v531, %v566
    %v568 = vadd.f32 %v532, %v566
    %v569 = vadd.f32 %v533, %v566
    %v570 = vadd.f32 %v534, %v566
    %v571 = vadd.f32 %v535, %v566
    %v572 = vadd.f32 %v536, %v566
    %v573 = vadd.f32 %v537, %v566
    %v574 = vadd.f32 %v538, %v566
    %v575 = vadd.f32 %v539, %v566
    %v576 = vadd.f32 %v540, %v566
    %v577 = vadd.f32 %v541, %v566
    %v578 = vadd.f32 %v542, %v566
    %v579 = vadd.f32 %v543, %v566
    %v580 = vadd.f32 %v544, %v566
    %v581 = vadd.f32 %v545, %v566
    %v582 = vadd.f32 %v546, %v566
    %v583 = vadd.f32 %v547, %v566
    %v584 = vadd.f32 %v548, %v566
    %v585 = vadd.f32 %v549, %v566
    %v586 = vadd.f32 %v550, %v566
    %v587 = vadd.f32 %v551, %v566
    %v588 = vadd.f32 %v552, %v566
    %v589 = vadd.f32 %v553, %v566
    %v590 = vadd.f32 %v554, %v566
    %v591 = vadd.f32 %v555, %v566
    %v592 = vadd.f32 %v556, %v566
    %v593 = vadd.f32 %v557, %v566
    %v594 = vadd.f32 %v558, %v566
    %v595 = vadd.f32 %v559, %v566
    %v596 = vadd.f32 %v560, %v566
    %v597 = vadd.f32 %v561, %v566
    %v598 = vadd.f32 %v562, %v566
    %v599 = vpack.c.bf16 %v568, %v567
    %v600 = vpack.c.bf16 %v570, %v569
    %v601 = vpack.c.bf16 %v572, %v571
    %v602 = vpack.c.bf16 %v574, %v573
    %v603 = vpack.c.bf16 %v576, %v575
    %v604 = vpack.c.bf16 %v578, %v577
    %v605 = vpack.c.bf16 %v580, %v579
    %v606 = vpack.c.bf16 %v582, %v581
    %v607 = vpack.c.bf16 %v584, %v583
    %v608 = vpack.c.bf16 %v586, %v585
    %v609 = vpack.c.bf16 %v588, %v587
    %v610 = vpack.c.bf16 %v590, %v589
    %v611 = vpack.c.bf16 %v592, %v591
    %v612 = vpack.c.bf16 %v594, %v593
    %v613 = vpack.c.bf16 %v596, %v595
    %v614 = vpack.c.bf16 %v598, %v597
    %v615 = vld [vmem:[#allocation8] sm:$0xf]
    %v616 = vld [vmem:[#allocation8 + $0x4] sm:$0xf]
    %v617 = vld [vmem:[#allocation8 + $0x8] sm:$0xf]
    %v618 = vld [vmem:[#allocation8 + $0xc] sm:$0xf]
    %v619 = vld [vmem:[#allocation8 + $0x10] sm:$0xf]
    %v620 = vld [vmem:[#allocation8 + $0x14] sm:$0xf]
    %v621 = vld [vmem:[#allocation8 + $0x18] sm:$0xf]
    %v622 = vld [vmem:[#allocation8 + $0x1c] sm:$0xf]
    %v623 = vld [vmem:[#allocation8 + $0x20] sm:$0xf]
    %v624 = vld [vmem:[#allocation8 + $0x24] sm:$0xf]
    %v625 = vld [vmem:[#allocation8 + $0x28] sm:$0xf]
    %v626 = vld [vmem:[#allocation8 + $0x2c] sm:$0xf]
    %v627 = vld [vmem:[#allocation8 + $0x30] sm:$0xf]
    %v628 = vld [vmem:[#allocation8 + $0x34] sm:$0xf]
    %v629 = vld [vmem:[#allocation8 + $0x38] sm:$0xf]
    %v630 = vld [vmem:[#allocation8 + $0x3c] sm:$0xf]
    %v631 = vlaneseq
    %v632 = vshrl.u32 %v631, 7
    %v633 = vsub.s32 2, %v632
    %v634 = vrot.slane %v110, %v633
    %v651 = vunpack.c.l.b16 %v615
    %v652 = vunpack.c.l.b16 %v616
    %v653 = vunpack.c.l.b16 %v617
    %v654 = vunpack.c.l.b16 %v618
    %v655 = vunpack.c.l.b16 %v619
    %v656 = vunpack.c.l.b16 %v620
    %v657 = vunpack.c.l.b16 %v621
    %v658 = vunpack.c.l.b16 %v622
    %v659 = vunpack.c.l.b16 %v623
    %v660 = vunpack.c.l.b16 %v624
    %v661 = vunpack.c.l.b16 %v625
    %v662 = vunpack.c.l.b16 %v626
    %v663 = vunpack.c.l.b16 %v627
    %v664 = vunpack.c.l.b16 %v628
    %v665 = vunpack.c.l.b16 %v629
    %v666 = vunpack.c.l.b16 %v630
    %v667 = vpack.c.b16 %v652, %v651
    %v668 = vpack.c.b16 %v654, %v653
    %v669 = vpack.c.b16 %v656, %v655
    %v670 = vpack.c.b16 %v658, %v657
    %v671 = vpack.c.b16 %v660, %v659
    %v672 = vpack.c.b16 %v662, %v661
    %v673 = vpack.c.b16 %v664, %v663
    %v674 = vpack.c.b16 %v666, %v665
    %683 = vmatprep.subr.bf16.mxu0 0
    %684 = vmatpush1.bf16.msra.mxu0 %v667
    %685 = vmatprep.subr.bf16.mxu0 0
    %686 = vmatpush1.bf16.msra.mxu0 %v668
    %687 = vmatprep.subr.bf16.mxu0 0
    %688 = vmatpush1.bf16.msra.mxu0 %v669
    %689 = vmatprep.subr.bf16.mxu0 0
    %690 = vmatpush1.bf16.msra.mxu0 %v670
    %691 = vmatprep.subr.bf16.mxu0 0
    %692 = vmatpush1.bf16.msra.mxu0 %v671
    %693 = vmatprep.subr.bf16.mxu0 0
    %694 = vmatpush1.bf16.msra.mxu0 %v672
    %695 = vmatprep.subr.bf16.mxu0 0
    %696 = vmatpush1.bf16.msra.mxu0 %v673
    %697 = vmatprep.subr.bf16.mxu0 0
    %698 = vmatpush1.bf16.msra.mxu0 %v674
    %699 = vmatprep.subr.bf16.mxu0 0
    %700 = vmatpush1.bf16.msra.mxu0 0
    %701 = vmatprep.subr.bf16.mxu0 0
    %702 = vmatpush1.bf16.msra.mxu0 0
    %703 = vmatprep.subr.bf16.mxu0 0
    %704 = vmatpush1.bf16.msra.mxu0 0
    %705 = vmatprep.subr.bf16.mxu0 0
    %706 = vmatpush1.bf16.msra.mxu0 0
    %707 = vmatprep.subr.bf16.mxu0 0
    %708 = vmatpush1.bf16.msra.mxu0 0
    %709 = vmatprep.subr.bf16.mxu0 0
    %710 = vmatpush1.bf16.msra.mxu0 0
    %711 = vmatprep.subr.bf16.mxu0 0
    %712 = vmatpush1.bf16.msra.mxu0 0
    %713 = vmatprep.subr.bf16.mxu0 0
    %714 = vmatpush1.bf16.msra.mxu0 0
    %715 = vmatprep.mubr.bf16.mxu0 0
    %716 = vmatmul.mubr.bf16.gmra.mrb[0].mxu0 %v599
    %v717 = vpop.f32.mrb[0].mxu0
    %v718 = vadd.f32 %v634, %v717
    %v719 = vpop.f32.mrb[0].mxu0
    %v720 = vpop.f32.mrb[0].mxu0
    %v721 = vadd.f32 %v634, %v720
    %v722 = vpop.f32.mrb[0].mxu0
    %723 = vmatprep.mubr.bf16.mxu0 0
    %724 = vmatmul.mubr.bf16.gmra.mrb[0].mxu0 %v600
    %v725 = vpop.f32.mrb[0].mxu0
    %v726 = vadd.f32 %v634, %v725
    %v727 = vpop.f32.mrb[0].mxu0
    %v728 = vpop.f32.mrb[0].mxu0
    %v729 = vadd.f32 %v634, %v728
    %v730 = vpop.f32.mrb[0].mxu0
    %731 = vmatprep.mubr.bf16.mxu0 0
    %732 = vmatmul.mubr.bf16.gmra.mrb[0].mxu0 %v601
    %v733 = vpop.f32.mrb[0].mxu0
    %v734 = vadd.f32 %v634, %v733
    %v735 = vpop.f32.mrb[0].mxu0
    %v736 = vpop.f32.mrb[0].mxu0
    %v737 = vadd.f32 %v634, %v736
    %v738 = vpop.f32.mrb[0].mxu0
    %739 = vmatprep.mubr.bf16.mxu0 0
    %740 = vmatmul.mubr.bf16.gmra.mrb[0].mxu0 %v602
    %v741 = vpop.f32.mrb[0].mxu0
    %v742 = vadd.f32 %v634, %v741
    %v743 = vpop.f32.mrb[0].mxu0
    %v744 = vpop.f32.mrb[0].mxu0
    %v745 = vadd.f32 %v634, %v744
    %v746 = vpop.f32.mrb[0].mxu0
    %747 = vmatprep.mubr.bf16.mxu0 0
    %748 = vmatmul.mubr.bf16.gmra.mrb[0].mxu0 %v603
    %v749 = vpop.f32.mrb[0].mxu0
    %v750 = vadd.f32 %v634, %v749
    %v751 = vpop.f32.mrb[0].mxu0
    %v752 = vpop.f32.mrb[0].mxu0
    %v753 = vadd.f32 %v634, %v752
    %v754 = vpop.f32.mrb[0].mxu0
    %755 = vmatprep.mubr.bf16.mxu0 0
    %756 = vmatmul.mubr.bf16.gmra.mrb[0].mxu0 %v604
    %v757 = vpop.f32.mrb[0].mxu0
    %v758 = vadd.f32 %v634, %v757
    %v759 = vpop.f32.mrb[0].mxu0
    %v760 = vpop.f32.mrb[0].mxu0
    %v761 = vadd.f32 %v634, %v760
    %v762 = vpop.f32.mrb[0].mxu0
    %763 = vmatprep.mubr.bf16.mxu0 0
    %764 = vmatmul.mubr.bf16.gmra.mrb[0].mxu0 %v605
    %v765 = vpop.f32.mrb[0].mxu0
    %v766 = vadd.f32 %v634, %v765
    %v767 = vpop.f32.mrb[0].mxu0
    %v768 = vpop.f32.mrb[0].mxu0
    %v769 = vadd.f32 %v634, %v768
    %v770 = vpop.f32.mrb[0].mxu0
    %771 = vmatprep.mubr.bf16.mxu0 0
    %772 = vmatmul.mubr.bf16.gmra.mrb[0].mxu0 %v606
    %v773 = vpop.f32.mrb[0].mxu0
    %v774 = vadd.f32 %v634, %v773
    %v775 = vpop.f32.mrb[0].mxu0
    %v776 = vpop.f32.mrb[0].mxu0
    %v777 = vadd.f32 %v634, %v776
    %v778 = vpop.f32.mrb[0].mxu0
    %779 = vmatprep.mubr.bf16.mxu0 0
    %780 = vmatmul.mubr.bf16.gmra.mrb[0].mxu0 %v607
    %v781 = vpop.f32.mrb[0].mxu0
    %v782 = vadd.f32 %v634, %v781
    %v783 = vpop.f32.mrb[0].mxu0
    %v784 = vpop.f32.mrb[0].mxu0
    %v785 = vadd.f32 %v634, %v784
    %v786 = vpop.f32.mrb[0].mxu0
    %787 = vmatprep.mubr.bf16.mxu0 0
    %788 = vmatmul.mubr.bf16.gmra.mrb[0].mxu0 %v608
    %v789 = vpop.f32.mrb[0].mxu0
    %v790 = vadd.f32 %v634, %v789
    %v791 = vpop.f32.mrb[0].mxu0
    %v792 = vpop.f32.mrb[0].mxu0
    %v793 = vadd.f32 %v634, %v792
    %v794 = vpop.f32.mrb[0].mxu0
    %795 = vmatprep.mubr.bf16.mxu0 0
    %796 = vmatmul.mubr.bf16.gmra.mrb[0].mxu0 %v609
    %v797 = vpop.f32.mrb[0].mxu0
    %v798 = vadd.f32 %v634, %v797
    %v799 = vpop.f32.mrb[0].mxu0
    %v800 = vpop.f32.mrb[0].mxu0
    %v801 = vadd.f32 %v634, %v800
    %v802 = vpop.f32.mrb[0].mxu0
    %803 = vmatprep.mubr.bf16.mxu0 0
    %804 = vmatmul.mubr.bf16.gmra.mrb[0].mxu0 %v610
    %v805 = vpop.f32.mrb[0].mxu0
    %v806 = vadd.f32 %v634, %v805
    %v807 = vpop.f32.mrb[0].mxu0
    %v808 = vpop.f32.mrb[0].mxu0
    %v809 = vadd.f32 %v634, %v808
    %v810 = vpop.f32.mrb[0].mxu0
    %811 = vmatprep.mubr.bf16.mxu0 0
    %812 = vmatmul.mubr.bf16.gmra.mrb[0].mxu0 %v611
    %v813 = vpop.f32.mrb[0].mxu0
    %v814 = vadd.f32 %v634, %v813
    %v815 = vpop.f32.mrb[0].mxu0
    %v816 = vpop.f32.mrb[0].mxu0
    %v817 = vadd.f32 %v634, %v816
    %v818 = vpop.f32.mrb[0].mxu0
    %819 = vmatprep.mubr.bf16.mxu0 0
    %820 = vmatmul.mubr.bf16.gmra.mrb[0].mxu0 %v612
    %v821 = vpop.f32.mrb[0].mxu0
    %v822 = vadd.f32 %v634, %v821
    %v823 = vpop.f32.mrb[0].mxu0
    %v824 = vpop.f32.mrb[0].mxu0
    %v825 = vadd.f32 %v634, %v824
    %v826 = vpop.f32.mrb[0].mxu0
    %827 = vmatprep.mubr.bf16.mxu0 0
    %828 = vmatmul.mubr.bf16.gmra.mrb[0].mxu0 %v613
    %v829 = vpop.f32.mrb[0].mxu0
    %v830 = vadd.f32 %v634, %v829
    %v831 = vpop.f32.mrb[0].mxu0
    %v832 = vpop.f32.mrb[0].mxu0
    %v833 = vadd.f32 %v634, %v832
    %v834 = vpop.f32.mrb[0].mxu0
    %835 = vmatprep.mubr.bf16.mxu0 0
    %836 = vmatmul.mubr.bf16.gmra.mrb[0].mxu0 %v614
    %v837 = vpop.f32.mrb[0].mxu0
    %v838 = vadd.f32 %v634, %v837
    %v839 = vpop.f32.mrb[0].mxu0
    %v840 = vpop.f32.mrb[0].mxu0
    %v841 = vadd.f32 %v634, %v840
    %v842 = vpop.f32.mrb[0].mxu0
    %843 = vdwg.mxu0
    %v844 = vmul.f32 %v718, 0.5
    %v845 = vmul.f32 %v721, 0.5
    %v846 = vmul.f32 %v726, 0.5
    %v847 = vmul.f32 %v729, 0.5
    %v848 = vmul.f32 %v734, 0.5
    %v849 = vmul.f32 %v737, 0.5
    %v850 = vmul.f32 %v742, 0.5
    %v851 = vmul.f32 %v745, 0.5
    %v852 = vmul.f32 %v750, 0.5
    %v853 = vmul.f32 %v753, 0.5
    %v854 = vmul.f32 %v758, 0.5
    %v855 = vmul.f32 %v761, 0.5
    %v856 = vmul.f32 %v766, 0.5
    %v857 = vmul.f32 %v769, 0.5
    %v858 = vmul.f32 %v774, 0.5
    %v859 = vmul.f32 %v777, 0.5
    %v860 = vmul.f32 %v782, 0.5
    %v861 = vmul.f32 %v785, 0.5
    %v862 = vmul.f32 %v790, 0.5
    %v863 = vmul.f32 %v793, 0.5
    %v864 = vmul.f32 %v798, 0.5
    %v865 = vmul.f32 %v801, 0.5
    %v866 = vmul.f32 %v806, 0.5
    %v867 = vmul.f32 %v809, 0.5
    %v868 = vmul.f32 %v814, 0.5
    %v869 = vmul.f32 %v817, 0.5
    %v870 = vmul.f32 %v822, 0.5
    %v871 = vmul.f32 %v825, 0.5
    %v872 = vmul.f32 %v830, 0.5
    %v873 = vmul.f32 %v833, 0.5
    %v874 = vmul.f32 %v838, 0.5
    %v875 = vmul.f32 %v841, 0.5
    %v876 = vmul.f32 %v718, 0.70710677
    %v877 = vmul.f32 %v721, 0.70710677
    %v878 = vmul.f32 %v726, 0.70710677
    %v879 = vmul.f32 %v729, 0.70710677
    %v880 = vmul.f32 %v734, 0.70710677
    %v881 = vmul.f32 %v737, 0.70710677
    %v882 = vmul.f32 %v742, 0.70710677
    %v883 = vmul.f32 %v745, 0.70710677
    %v884 = vmul.f32 %v750, 0.70710677
    %v885 = vmul.f32 %v753, 0.70710677
    %v886 = vmul.f32 %v758, 0.70710677
    %v887 = vmul.f32 %v761, 0.70710677
    %v888 = vmul.f32 %v766, 0.70710677
    %v889 = vmul.f32 %v769, 0.70710677
    %v890 = vmul.f32 %v774, 0.70710677
    %v891 = vmul.f32 %v777, 0.70710677
    %v892 = vmul.f32 %v782, 0.70710677
    %v893 = vmul.f32 %v785, 0.70710677
    %v894 = vmul.f32 %v790, 0.70710677
    %v895 = vmul.f32 %v793, 0.70710677
    %v896 = vmul.f32 %v798, 0.70710677
    %v897 = vmul.f32 %v801, 0.70710677
    %v898 = vmul.f32 %v806, 0.70710677
    %v899 = vmul.f32 %v809, 0.70710677
    %v900 = vmul.f32 %v814, 0.70710677
    %v901 = vmul.f32 %v817, 0.70710677
    %v902 = vmul.f32 %v822, 0.70710677
    %v903 = vmul.f32 %v825, 0.70710677
    %v904 = vmul.f32 %v830, 0.70710677
    %v905 = vmul.f32 %v833, 0.70710677
    %v906 = vmul.f32 %v838, 0.70710677
    %v907 = vmul.f32 %v841, 0.70710677
    %v908 = verf.f32.pop %v876
    %v909 = verf.f32.pop %v877
    %v910 = verf.f32.pop %v878
    %v911 = verf.f32.pop %v879
    %v912 = verf.f32.pop %v880
    %v913 = verf.f32.pop %v881
    %v914 = verf.f32.pop %v882
    %v915 = verf.f32.pop %v883
    %v916 = verf.f32.pop %v884
    %v917 = verf.f32.pop %v885
    %v918 = verf.f32.pop %v886
    %v919 = verf.f32.pop %v887
    %v920 = verf.f32.pop %v888
    %v921 = verf.f32.pop %v889
    %v922 = verf.f32.pop %v890
    %v923 = verf.f32.pop %v891
    %v924 = verf.f32.pop %v892
    %v925 = verf.f32.pop %v893
    %v926 = verf.f32.pop %v894
    %v927 = verf.f32.pop %v895
    %v928 = verf.f32.pop %v896
    %v929 = verf.f32.pop %v897
    %v930 = verf.f32.pop %v898
    %v931 = verf.f32.pop %v899
    %v932 = verf.f32.pop %v900
    %v933 = verf.f32.pop %v901
    %v934 = verf.f32.pop %v902
    %v935 = verf.f32.pop %v903
    %v936 = verf.f32.pop %v904
    %v937 = verf.f32.pop %v905
    %v938 = verf.f32.pop %v906
    %v939 = verf.f32.pop %v907
    %v940 = vadd.f32 %v908, 1.0
    %v941 = vadd.f32 %v909, 1.0
    %v942 = vadd.f32 %v910, 1.0
    %v943 = vadd.f32 %v911, 1.0
    %v944 = vadd.f32 %v912, 1.0
    %v945 = vadd.f32 %v913, 1.0
    %v946 = vadd.f32 %v914, 1.0
    %v947 = vadd.f32 %v915, 1.0
    %v948 = vadd.f32 %v916, 1.0
    %v949 = vadd.f32 %v917, 1.0
    %v950 = vadd.f32 %v918, 1.0
    %v951 = vadd.f32 %v919, 1.0
    %v952 = vadd.f32 %v920, 1.0
    %v953 = vadd.f32 %v921, 1.0
    %v954 = vadd.f32 %v922, 1.0
    %v955 = vadd.f32 %v923, 1.0
    %v956 = vadd.f32 %v924, 1.0
    %v957 = vadd.f32 %v925, 1.0
    %v958 = vadd.f32 %v926, 1.0
    %v959 = vadd.f32 %v927, 1.0
    %v960 = vadd.f32 %v928, 1.0
    %v961 = vadd.f32 %v929, 1.0
    %v962 = vadd.f32 %v930, 1.0
    %v963 = vadd.f32 %v931, 1.0
    %v964 = vadd.f32 %v932, 1.0
    %v965 = vadd.f32 %v933, 1.0
    %v966 = vadd.f32 %v934, 1.0
    %v967 = vadd.f32 %v935, 1.0
    %v968 = vadd.f32 %v936, 1.0
    %v969 = vadd.f32 %v937, 1.0
    %v970 = vadd.f32 %v938, 1.0
    %v971 = vadd.f32 %v939, 1.0
    %v972 = vmul.f32 %v844, %v940
    %v973 = vmul.f32 %v845, %v941
    %v974 = vmul.f32 %v846, %v942
    %v975 = vmul.f32 %v847, %v943
    %v976 = vmul.f32 %v848, %v944
    %v977 = vmul.f32 %v849, %v945
    %v978 = vmul.f32 %v850, %v946
    %v979 = vmul.f32 %v851, %v947
    %v980 = vmul.f32 %v852, %v948
    %v981 = vmul.f32 %v853, %v949
    %v982 = vmul.f32 %v854, %v950
    %v983 = vmul.f32 %v855, %v951
    %v984 = vmul.f32 %v856, %v952
    %v985 = vmul.f32 %v857, %v953
    %v986 = vmul.f32 %v858, %v954
    %v987 = vmul.f32 %v859, %v955
    %v988 = vmul.f32 %v860, %v956
    %v989 = vmul.f32 %v861, %v957
    %v990 = vmul.f32 %v862, %v958
    %v991 = vmul.f32 %v863, %v959
    %v992 = vmul.f32 %v864, %v960
    %v993 = vmul.f32 %v865, %v961
    %v994 = vmul.f32 %v866, %v962
    %v995 = vmul.f32 %v867, %v963
    %v996 = vmul.f32 %v868, %v964
    %v997 = vmul.f32 %v869, %v965
    %v998 = vmul.f32 %v870, %v966
    %v999 = vmul.f32 %v871, %v967
    %v1000 = vmul.f32 %v872, %v968
    %v1001 = vmul.f32 %v873, %v969
    %v1002 = vmul.f32 %v874, %v970
    %v1003 = vmul.f32 %v875, %v971
    %1004 = vadd.xlane.f32.xlu0 %v972
    %v1005 = vpop.xlane.xlu0 %1004
    %1006 = vadd.xlane.f32.xlu0 %v973
    %v1007 = vpop.xlane.xlu0 %1006
    %1008 = vadd.xlane.f32.xlu0 %v974
    %v1009 = vpop.xlane.xlu0 %1008
    %1010 = vadd.xlane.f32.xlu0 %v975
    %v1011 = vpop.xlane.xlu0 %1010
    %1012 = vadd.xlane.f32.xlu0 %v976
    %v1013 = vpop.xlane.xlu0 %1012
    %1014 = vadd.xlane.f32.xlu0 %v977
    %v1015 = vpop.xlane.xlu0 %1014
    %1016 = vadd.xlane.f32.xlu0 %v978
    %v1017 = vpop.xlane.xlu0 %1016
    %1018 = vadd.xlane.f32.xlu0 %v979
    %v1019 = vpop.xlane.xlu0 %1018
    %1020 = vadd.xlane.f32.xlu0 %v980
    %v1021 = vpop.xlane.xlu0 %1020
    %1022 = vadd.xlane.f32.xlu0 %v981
    %v1023 = vpop.xlane.xlu0 %1022
    %1024 = vadd.xlane.f32.xlu0 %v982
    %v1025 = vpop.xlane.xlu0 %1024
    %1026 = vadd.xlane.f32.xlu0 %v983
    %v1027 = vpop.xlane.xlu0 %1026
    %1028 = vadd.xlane.f32.xlu0 %v984
    %v1029 = vpop.xlane.xlu0 %1028
    %1030 = vadd.xlane.f32.xlu0 %v985
    %v1031 = vpop.xlane.xlu0 %1030
    %1032 = vadd.xlane.f32.xlu0 %v986
    %v1033 = vpop.xlane.xlu0 %1032
    %1034 = vadd.xlane.f32.xlu0 %v987
    %v1035 = vpop.xlane.xlu0 %1034
    %1036 = vadd.xlane.f32.xlu0 %v988
    %v1037 = vpop.xlane.xlu0 %1036
    %1038 = vadd.xlane.f32.xlu0 %v989
    %v1039 = vpop.xlane.xlu0 %1038
    %1040 = vadd.xlane.f32.xlu0 %v990
    %v1041 = vpop.xlane.xlu0 %1040
    %1042 = vadd.xlane.f32.xlu0 %v991
    %v1043 = vpop.xlane.xlu0 %1042
    %1044 = vadd.xlane.f32.xlu0 %v992
    %v1045 = vpop.xlane.xlu0 %1044
    %1046 = vadd.xlane.f32.xlu0 %v993
    %v1047 = vpop.xlane.xlu0 %1046
    %1048 = vadd.xlane.f32.xlu0 %v994
    %v1049 = vpop.xlane.xlu0 %1048
    %1050 = vadd.xlane.f32.xlu0 %v995
    %v1051 = vpop.xlane.xlu0 %1050
    %1052 = vadd.xlane.f32.xlu0 %v996
    %v1053 = vpop.xlane.xlu0 %1052
    %1054 = vadd.xlane.f32.xlu0 %v997
    %v1055 = vpop.xlane.xlu0 %1054
    %1056 = vadd.xlane.f32.xlu0 %v998
    %v1057 = vpop.xlane.xlu0 %1056
    %1058 = vadd.xlane.f32.xlu0 %v999
    %v1059 = vpop.xlane.xlu0 %1058
    %1060 = vadd.xlane.f32.xlu0 %v1000
    %v1061 = vpop.xlane.xlu0 %1060
    %1062 = vadd.xlane.f32.xlu0 %v1001
    %v1063 = vpop.xlane.xlu0 %1062
    %1064 = vadd.xlane.f32.xlu0 %v1002
    %v1065 = vpop.xlane.xlu0 %1064
    %1066 = vadd.xlane.f32.xlu0 %v1003
    %v1067 = vpop.xlane.xlu0 %1066
    %v1068 = vmul.f32 %v1005, 0.010416667
    %v1069 = vmul.f32 %v1007, 0.010416667
    %v1070 = vmul.f32 %v1009, 0.010416667
    %v1071 = vmul.f32 %v1011, 0.010416667
    %v1072 = vmul.f32 %v1013, 0.010416667
    %v1073 = vmul.f32 %v1015, 0.010416667
    %v1074 = vmul.f32 %v1017, 0.010416667
    %v1075 = vmul.f32 %v1019, 0.010416667
    %v1076 = vmul.f32 %v1021, 0.010416667
    %v1077 = vmul.f32 %v1023, 0.010416667
    %v1078 = vmul.f32 %v1025, 0.010416667
    %v1079 = vmul.f32 %v1027, 0.010416667
    %v1080 = vmul.f32 %v1029, 0.010416667
    %v1081 = vmul.f32 %v1031, 0.010416667
    %v1082 = vmul.f32 %v1033, 0.010416667
    %v1083 = vmul.f32 %v1035, 0.010416667
    %v1084 = vmul.f32 %v1037, 0.010416667
    %v1085 = vmul.f32 %v1039, 0.010416667
    %v1086 = vmul.f32 %v1041, 0.010416667
    %v1087 = vmul.f32 %v1043, 0.010416667
    %v1088 = vmul.f32 %v1045, 0.010416667
    %v1089 = vmul.f32 %v1047, 0.010416667
    %v1090 = vmul.f32 %v1049, 0.010416667
    %v1091 = vmul.f32 %v1051, 0.010416667
    %v1092 = vmul.f32 %v1053, 0.010416667
    %v1093 = vmul.f32 %v1055, 0.010416667
    %v1094 = vmul.f32 %v1057, 0.010416667
    %v1095 = vmul.f32 %v1059, 0.010416667
    %v1096 = vmul.f32 %v1061, 0.010416667
    %v1097 = vmul.f32 %v1063, 0.010416667
    %v1098 = vmul.f32 %v1065, 0.010416667
    %v1099 = vmul.f32 %v1067, 0.010416667
    %v1100 = vsub.f32 %v972, %v1068
    %v1101 = vsub.f32 %v973, %v1069
    %v1102 = vsub.f32 %v974, %v1070
    %v1103 = vsub.f32 %v975, %v1071
    %v1104 = vsub.f32 %v976, %v1072
    %v1105 = vsub.f32 %v977, %v1073
    %v1106 = vsub.f32 %v978, %v1074
    %v1107 = vsub.f32 %v979, %v1075
    %v1108 = vsub.f32 %v980, %v1076
    %v1109 = vsub.f32 %v981, %v1077
    %v1110 = vsub.f32 %v982, %v1078
    %v1111 = vsub.f32 %v983, %v1079
    %v1112 = vsub.f32 %v984, %v1080
    %v1113 = vsub.f32 %v985, %v1081
    %v1114 = vsub.f32 %v986, %v1082
    %v1115 = vsub.f32 %v987, %v1083
    %v1116 = vsub.f32 %v988, %v1084
    %v1117 = vsub.f32 %v989, %v1085
    %v1118 = vsub.f32 %v990, %v1086
    %v1119 = vsub.f32 %v991, %v1087
    %v1120 = vsub.f32 %v992, %v1088
    %v1121 = vsub.f32 %v993, %v1089
    %v1122 = vsub.f32 %v994, %v1090
    %v1123 = vsub.f32 %v995, %v1091
    %v1124 = vsub.f32 %v996, %v1092
    %v1125 = vsub.f32 %v997, %v1093
    %v1126 = vsub.f32 %v998, %v1094
    %v1127 = vsub.f32 %v999, %v1095
    %v1128 = vsub.f32 %v1000, %v1096
    %v1129 = vsub.f32 %v1001, %v1097
    %v1130 = vsub.f32 %v1002, %v1098
    %v1131 = vsub.f32 %v1003, %v1099
    %v1132 = vmul.f32 %v1100, %v109
    %v1133 = vmul.f32 %v1101, %v109
    %v1134 = vmul.f32 %v1102, %v109
    %v1135 = vmul.f32 %v1103, %v109
    %v1136 = vmul.f32 %v1104, %v109
    %v1137 = vmul.f32 %v1105, %v109
    %v1138 = vmul.f32 %v1106, %v109
    %v1139 = vmul.f32 %v1107, %v109
    %v1140 = vmul.f32 %v1108, %v109
    %v1141 = vmul.f32 %v1109, %v109
    %v1142 = vmul.f32 %v1110, %v109
    %v1143 = vmul.f32 %v1111, %v109
    %v1144 = vmul.f32 %v1112, %v109
    %v1145 = vmul.f32 %v1113, %v109
    %v1146 = vmul.f32 %v1114, %v109
    %v1147 = vmul.f32 %v1115, %v109
    %v1148 = vmul.f32 %v1116, %v109
    %v1149 = vmul.f32 %v1117, %v109
    %v1150 = vmul.f32 %v1118, %v109
    %v1151 = vmul.f32 %v1119, %v109
    %v1152 = vmul.f32 %v1120, %v109
    %v1153 = vmul.f32 %v1121, %v109
    %v1154 = vmul.f32 %v1122, %v109
    %v1155 = vmul.f32 %v1123, %v109
    %v1156 = vmul.f32 %v1124, %v109
    %v1157 = vmul.f32 %v1125, %v109
    %v1158 = vmul.f32 %v1126, %v109
    %v1159 = vmul.f32 %v1127, %v109
    %v1160 = vmul.f32 %v1128, %v109
    %v1161 = vmul.f32 %v1129, %v109
    %v1162 = vmul.f32 %v1130, %v109
    %v1163 = vmul.f32 %v1131, %v109
    %v1164 = vmul.f32 %v1132, %v1132
    %v1165 = vmul.f32 %v1133, %v1133
    %v1166 = vmul.f32 %v1134, %v1134
    %v1167 = vmul.f32 %v1135, %v1135
    %v1168 = vmul.f32 %v1136, %v1136
    %v1169 = vmul.f32 %v1137, %v1137
    %v1170 = vmul.f32 %v1138, %v1138
    %v1171 = vmul.f32 %v1139, %v1139
    %v1172 = vmul.f32 %v1140, %v1140
    %v1173 = vmul.f32 %v1141, %v1141
    %v1174 = vmul.f32 %v1142, %v1142
    %v1175 = vmul.f32 %v1143, %v1143
    %v1176 = vmul.f32 %v1144, %v1144
    %v1177 = vmul.f32 %v1145, %v1145
    %v1178 = vmul.f32 %v1146, %v1146
    %v1179 = vmul.f32 %v1147, %v1147
    %v1180 = vmul.f32 %v1148, %v1148
    %v1181 = vmul.f32 %v1149, %v1149
    %v1182 = vmul.f32 %v1150, %v1150
    %v1183 = vmul.f32 %v1151, %v1151
    %v1184 = vmul.f32 %v1152, %v1152
    %v1185 = vmul.f32 %v1153, %v1153
    %v1186 = vmul.f32 %v1154, %v1154
    %v1187 = vmul.f32 %v1155, %v1155
    %v1188 = vmul.f32 %v1156, %v1156
    %v1189 = vmul.f32 %v1157, %v1157
    %v1190 = vmul.f32 %v1158, %v1158
    %v1191 = vmul.f32 %v1159, %v1159
    %v1192 = vmul.f32 %v1160, %v1160
    %v1193 = vmul.f32 %v1161, %v1161
    %v1194 = vmul.f32 %v1162, %v1162
    %v1195 = vmul.f32 %v1163, %v1163
    %1196 = vadd.xlane.f32.xlu0 %v1164
    %v1197 = vpop.xlane.xlu0 %1196
    %1198 = vadd.xlane.f32.xlu0 %v1165
    %v1199 = vpop.xlane.xlu0 %1198
    %1200 = vadd.xlane.f32.xlu0 %v1166
    %v1201 = vpop.xlane.xlu0 %1200
    %1202 = vadd.xlane.f32.xlu0 %v1167
    %v1203 = vpop.xlane.xlu0 %1202
    %1204 = vadd.xlane.f32.xlu0 %v1168
    %v1205 = vpop.xlane.xlu0 %1204
    %1206 = vadd.xlane.f32.xlu0 %v1169
    %v1207 = vpop.xlane.xlu0 %1206
    %1208 = vadd.xlane.f32.xlu0 %v1170
    %v1209 = vpop.xlane.xlu0 %1208
    %1210 = vadd.xlane.f32.xlu0 %v1171
    %v1211 = vpop.xlane.xlu0 %1210
    %1212 = vadd.xlane.f32.xlu0 %v1172
    %v1213 = vpop.xlane.xlu0 %1212
    %1214 = vadd.xlane.f32.xlu0 %v1173
    %v1215 = vpop.xlane.xlu0 %1214
    %1216 = vadd.xlane.f32.xlu0 %v1174
    %v1217 = vpop.xlane.xlu0 %1216
    %1218 = vadd.xlane.f32.xlu0 %v1175
    %v1219 = vpop.xlane.xlu0 %1218
    %1220 = vadd.xlane.f32.xlu0 %v1176
    %v1221 = vpop.xlane.xlu0 %1220
    %1222 = vadd.xlane.f32.xlu0 %v1177
    %v1223 = vpop.xlane.xlu0 %1222
    %1224 = vadd.xlane.f32.xlu0 %v1178
    %v1225 = vpop.xlane.xlu0 %1224
    %1226 = vadd.xlane.f32.xlu0 %v1179
    %v1227 = vpop.xlane.xlu0 %1226
    %1228 = vadd.xlane.f32.xlu0 %v1180
    %v1229 = vpop.xlane.xlu0 %1228
    %1230 = vadd.xlane.f32.xlu0 %v1181
    %v1231 = vpop.xlane.xlu0 %1230
    %1232 = vadd.xlane.f32.xlu0 %v1182
    %v1233 = vpop.xlane.xlu0 %1232
    %1234 = vadd.xlane.f32.xlu0 %v1183
    %v1235 = vpop.xlane.xlu0 %1234
    %1236 = vadd.xlane.f32.xlu0 %v1184
    %v1237 = vpop.xlane.xlu0 %1236
    %1238 = vadd.xlane.f32.xlu0 %v1185
    %v1239 = vpop.xlane.xlu0 %1238
    %1240 = vadd.xlane.f32.xlu0 %v1186
    %v1241 = vpop.xlane.xlu0 %1240
    %1242 = vadd.xlane.f32.xlu0 %v1187
    %v1243 = vpop.xlane.xlu0 %1242
    %1244 = vadd.xlane.f32.xlu0 %v1188
    %v1245 = vpop.xlane.xlu0 %1244
    %1246 = vadd.xlane.f32.xlu0 %v1189
    %v1247 = vpop.xlane.xlu0 %1246
    %1248 = vadd.xlane.f32.xlu0 %v1190
    %v1249 = vpop.xlane.xlu0 %1248
    %1250 = vadd.xlane.f32.xlu0 %v1191
    %v1251 = vpop.xlane.xlu0 %1250
    %1252 = vadd.xlane.f32.xlu0 %v1192
    %v1253 = vpop.xlane.xlu0 %1252
    %1254 = vadd.xlane.f32.xlu0 %v1193
    %v1255 = vpop.xlane.xlu0 %1254
    %1256 = vadd.xlane.f32.xlu0 %v1194
    %v1257 = vpop.xlane.xlu0 %1256
    %1258 = vadd.xlane.f32.xlu0 %v1195
    %v1259 = vpop.xlane.xlu0 %1258
    %v1260 = vmul.f32 %v1197, 0.010416667
    %v1261 = vmul.f32 %v1199, 0.010416667
    %v1262 = vmul.f32 %v1201, 0.010416667
    %v1263 = vmul.f32 %v1203, 0.010416667
    %v1264 = vmul.f32 %v1205, 0.010416667
    %v1265 = vmul.f32 %v1207, 0.010416667
    %v1266 = vmul.f32 %v1209, 0.010416667
    %v1267 = vmul.f32 %v1211, 0.010416667
    %v1268 = vmul.f32 %v1213, 0.010416667
    %v1269 = vmul.f32 %v1215, 0.010416667
    %v1270 = vmul.f32 %v1217, 0.010416667
    %v1271 = vmul.f32 %v1219, 0.010416667
    %v1272 = vmul.f32 %v1221, 0.010416667
    %v1273 = vmul.f32 %v1223, 0.010416667
    %v1274 = vmul.f32 %v1225, 0.010416667
    %v1275 = vmul.f32 %v1227, 0.010416667
    %v1276 = vmul.f32 %v1229, 0.010416667
    %v1277 = vmul.f32 %v1231, 0.010416667
    %v1278 = vmul.f32 %v1233, 0.010416667
    %v1279 = vmul.f32 %v1235, 0.010416667
    %v1280 = vmul.f32 %v1237, 0.010416667
    %v1281 = vmul.f32 %v1239, 0.010416667
    %v1282 = vmul.f32 %v1241, 0.010416667
    %v1283 = vmul.f32 %v1243, 0.010416667
    %v1284 = vmul.f32 %v1245, 0.010416667
    %v1285 = vmul.f32 %v1247, 0.010416667
    %v1286 = vmul.f32 %v1249, 0.010416667
    %v1287 = vmul.f32 %v1251, 0.010416667
    %v1288 = vmul.f32 %v1253, 0.010416667
    %v1289 = vmul.f32 %v1255, 0.010416667
    %v1290 = vmul.f32 %v1257, 0.010416667
    %v1291 = vmul.f32 %v1259, 0.010416667
    %v1292 = vadd.f32 %v1260, 1e-05
    %v1293 = vadd.f32 %v1261, 1e-05
    %v1294 = vadd.f32 %v1262, 1e-05
    %v1295 = vadd.f32 %v1263, 1e-05
    %v1296 = vadd.f32 %v1264, 1e-05
    %v1297 = vadd.f32 %v1265, 1e-05
    %v1298 = vadd.f32 %v1266, 1e-05
    %v1299 = vadd.f32 %v1267, 1e-05
    %v1300 = vadd.f32 %v1268, 1e-05
    %v1301 = vadd.f32 %v1269, 1e-05
    %v1302 = vadd.f32 %v1270, 1e-05
    %v1303 = vadd.f32 %v1271, 1e-05
    %v1304 = vadd.f32 %v1272, 1e-05
    %v1305 = vadd.f32 %v1273, 1e-05
    %v1306 = vadd.f32 %v1274, 1e-05
    %v1307 = vadd.f32 %v1275, 1e-05
    %v1308 = vadd.f32 %v1276, 1e-05
    %v1309 = vadd.f32 %v1277, 1e-05
    %v1310 = vadd.f32 %v1278, 1e-05
    %v1311 = vadd.f32 %v1279, 1e-05
    %v1312 = vadd.f32 %v1280, 1e-05
    %v1313 = vadd.f32 %v1281, 1e-05
    %v1314 = vadd.f32 %v1282, 1e-05
    %v1315 = vadd.f32 %v1283, 1e-05
    %v1316 = vadd.f32 %v1284, 1e-05
    %v1317 = vadd.f32 %v1285, 1e-05
    %v1318 = vadd.f32 %v1286, 1e-05
    %v1319 = vadd.f32 %v1287, 1e-05
    %v1320 = vadd.f32 %v1288, 1e-05
    %v1321 = vadd.f32 %v1289, 1e-05
    %v1322 = vadd.f32 %v1290, 1e-05
    %v1323 = vadd.f32 %v1291, 1e-05
    %v1324 = vrsqrt.pop %v1292
    %v1325 = vrsqrt.pop %v1293
    %v1326 = vrsqrt.pop %v1294
    %v1327 = vrsqrt.pop %v1295
    %v1328 = vrsqrt.pop %v1296
    %v1329 = vrsqrt.pop %v1297
    %v1330 = vrsqrt.pop %v1298
    %v1331 = vrsqrt.pop %v1299
    %v1332 = vrsqrt.pop %v1300
    %v1333 = vrsqrt.pop %v1301
    %v1334 = vrsqrt.pop %v1302
    %v1335 = vrsqrt.pop %v1303
    %v1336 = vrsqrt.pop %v1304
    %v1337 = vrsqrt.pop %v1305
    %v1338 = vrsqrt.pop %v1306
    %v1339 = vrsqrt.pop %v1307
    %v1340 = vrsqrt.pop %v1308
    %v1341 = vrsqrt.pop %v1309
    %v1342 = vrsqrt.pop %v1310
    %v1343 = vrsqrt.pop %v1311
    %v1344 = vrsqrt.pop %v1312
    %v1345 = vrsqrt.pop %v1313
    %v1346 = vrsqrt.pop %v1314
    %v1347 = vrsqrt.pop %v1315
    %v1348 = vrsqrt.pop %v1316
    %v1349 = vrsqrt.pop %v1317
    %v1350 = vrsqrt.pop %v1318
    %v1351 = vrsqrt.pop %v1319
    %v1352 = vrsqrt.pop %v1320
    %v1353 = vrsqrt.pop %v1321
    %v1354 = vrsqrt.pop %v1322
    %v1355 = vrsqrt.pop %v1323
    %v1356 = vmul.f32 %v1132, %v1324
    %v1357 = vmul.f32 %v1133, %v1325
    %v1358 = vmul.f32 %v1134, %v1326
    %v1359 = vmul.f32 %v1135, %v1327
    %v1360 = vmul.f32 %v1136, %v1328
    %v1361 = vmul.f32 %v1137, %v1329
    %v1362 = vmul.f32 %v1138, %v1330
    %v1363 = vmul.f32 %v1139, %v1331
    %v1364 = vmul.f32 %v1140, %v1332
    %v1365 = vmul.f32 %v1141, %v1333
    %v1366 = vmul.f32 %v1142, %v1334
    %v1367 = vmul.f32 %v1143, %v1335
    %v1368 = vmul.f32 %v1144, %v1336
    %v1369 = vmul.f32 %v1145, %v1337
    %v1370 = vmul.f32 %v1146, %v1338
    %v1371 = vmul.f32 %v1147, %v1339
    %v1372 = vmul.f32 %v1148, %v1340
    %v1373 = vmul.f32 %v1149, %v1341
    %v1374 = vmul.f32 %v1150, %v1342
    %v1375 = vmul.f32 %v1151, %v1343
    %v1376 = vmul.f32 %v1152, %v1344
    %v1377 = vmul.f32 %v1153, %v1345
    %v1378 = vmul.f32 %v1154, %v1346
    %v1379 = vmul.f32 %v1155, %v1347
    %v1380 = vmul.f32 %v1156, %v1348
    %v1381 = vmul.f32 %v1157, %v1349
    %v1382 = vmul.f32 %v1158, %v1350
    %v1383 = vmul.f32 %v1159, %v1351
    %v1384 = vmul.f32 %v1160, %v1352
    %v1385 = vmul.f32 %v1161, %v1353
    %v1386 = vmul.f32 %v1162, %v1354
    %v1387 = vmul.f32 %v1163, %v1355
    %v1388 = vlaneseq
    %v1389 = vshrl.u32 %v1388, 7
    %v1390 = vsub.s32 3, %v1389
    %v1391 = vrot.slane %v110, %v1390
    %v1392 = vmul.f32 %v1356, %v1391
    %v1393 = vmul.f32 %v1357, %v1391
    %v1394 = vmul.f32 %v1358, %v1391
    %v1395 = vmul.f32 %v1359, %v1391
    %v1396 = vmul.f32 %v1360, %v1391
    %v1397 = vmul.f32 %v1361, %v1391
    %v1398 = vmul.f32 %v1362, %v1391
    %v1399 = vmul.f32 %v1363, %v1391
    %v1400 = vmul.f32 %v1364, %v1391
    %v1401 = vmul.f32 %v1365, %v1391
    %v1402 = vmul.f32 %v1366, %v1391
    %v1403 = vmul.f32 %v1367, %v1391
    %v1404 = vmul.f32 %v1368, %v1391
    %v1405 = vmul.f32 %v1369, %v1391
    %v1406 = vmul.f32 %v1370, %v1391
    %v1407 = vmul.f32 %v1371, %v1391
    %v1408 = vmul.f32 %v1372, %v1391
    %v1409 = vmul.f32 %v1373, %v1391
    %v1410 = vmul.f32 %v1374, %v1391
    %v1411 = vmul.f32 %v1375, %v1391
    %v1412 = vmul.f32 %v1376, %v1391
    %v1413 = vmul.f32 %v1377, %v1391
    %v1414 = vmul.f32 %v1378, %v1391
    %v1415 = vmul.f32 %v1379, %v1391
    %v1416 = vmul.f32 %v1380, %v1391
    %v1417 = vmul.f32 %v1381, %v1391
    %v1418 = vmul.f32 %v1382, %v1391
    %v1419 = vmul.f32 %v1383, %v1391
    %v1420 = vmul.f32 %v1384, %v1391
    %v1421 = vmul.f32 %v1385, %v1391
    %v1422 = vmul.f32 %v1386, %v1391
    %v1423 = vmul.f32 %v1387, %v1391
    %v1424 = vlaneseq
    %v1425 = vshrl.u32 %v1424, 7
    %v1426 = vsub.s32 4, %v1425
    %v1427 = vrot.slane %v110, %v1426
    %v1428 = vadd.f32 %v1392, %v1427
    %v1429 = vadd.f32 %v1393, %v1427
    %v1430 = vadd.f32 %v1394, %v1427
    %v1431 = vadd.f32 %v1395, %v1427
    %v1432 = vadd.f32 %v1396, %v1427
    %v1433 = vadd.f32 %v1397, %v1427
    %v1434 = vadd.f32 %v1398, %v1427
    %v1435 = vadd.f32 %v1399, %v1427
    %v1436 = vadd.f32 %v1400, %v1427
    %v1437 = vadd.f32 %v1401, %v1427
    %v1438 = vadd.f32 %v1402, %v1427
    %v1439 = vadd.f32 %v1403, %v1427
    %v1440 = vadd.f32 %v1404, %v1427
    %v1441 = vadd.f32 %v1405, %v1427
    %v1442 = vadd.f32 %v1406, %v1427
    %v1443 = vadd.f32 %v1407, %v1427
    %v1444 = vadd.f32 %v1408, %v1427
    %v1445 = vadd.f32 %v1409, %v1427
    %v1446 = vadd.f32 %v1410, %v1427
    %v1447 = vadd.f32 %v1411, %v1427
    %v1448 = vadd.f32 %v1412, %v1427
    %v1449 = vadd.f32 %v1413, %v1427
    %v1450 = vadd.f32 %v1414, %v1427
    %v1451 = vadd.f32 %v1415, %v1427
    %v1452 = vadd.f32 %v1416, %v1427
    %v1453 = vadd.f32 %v1417, %v1427
    %v1454 = vadd.f32 %v1418, %v1427
    %v1455 = vadd.f32 %v1419, %v1427
    %v1456 = vadd.f32 %v1420, %v1427
    %v1457 = vadd.f32 %v1421, %v1427
    %v1458 = vadd.f32 %v1422, %v1427
    %v1459 = vadd.f32 %v1423, %v1427
    %v1460 = vpack.c.bf16 %v1429, %v1428
    %v1461 = vpack.c.bf16 %v1431, %v1430
    %v1462 = vpack.c.bf16 %v1433, %v1432
    %v1463 = vpack.c.bf16 %v1435, %v1434
    %v1464 = vpack.c.bf16 %v1437, %v1436
    %v1465 = vpack.c.bf16 %v1439, %v1438
    %v1466 = vpack.c.bf16 %v1441, %v1440
    %v1467 = vpack.c.bf16 %v1443, %v1442
    %v1468 = vpack.c.bf16 %v1445, %v1444
    %v1469 = vpack.c.bf16 %v1447, %v1446
    %v1470 = vpack.c.bf16 %v1449, %v1448
    %v1471 = vpack.c.bf16 %v1451, %v1450
    %v1472 = vpack.c.bf16 %v1453, %v1452
    %v1473 = vpack.c.bf16 %v1455, %v1454
    %v1474 = vpack.c.bf16 %v1457, %v1456
    %v1475 = vpack.c.bf16 %v1459, %v1458
    %v1476 = vld [vmem:[#allocation10] sm:$0xf]
    %v1477 = vld [vmem:[#allocation10 + $0x4] sm:$0xf]
    %v1478 = vld [vmem:[#allocation10 + $0x8] sm:$0xf]
    %v1479 = vld [vmem:[#allocation10 + $0xc] sm:$0xf]
    %v1480 = vld [vmem:[#allocation10 + $0x10] sm:$0xf]
    %v1481 = vld [vmem:[#allocation10 + $0x14] sm:$0xf]
    %v1482 = vld [vmem:[#allocation10 + $0x18] sm:$0xf]
    %v1483 = vld [vmem:[#allocation10 + $0x1c] sm:$0xf]
    %v1484 = vld [vmem:[#allocation10 + $0x20] sm:$0xf]
    %v1485 = vld [vmem:[#allocation10 + $0x24] sm:$0xf]
    %v1486 = vld [vmem:[#allocation10 + $0x28] sm:$0xf]
    %v1487 = vld [vmem:[#allocation10 + $0x2c] sm:$0xf]
    %v1488 = vld [vmem:[#allocation10 + $0x30] sm:$0xf]
    %v1489 = vld [vmem:[#allocation10 + $0x34] sm:$0xf]
    %v1490 = vld [vmem:[#allocation10 + $0x38] sm:$0xf]
    %v1491 = vld [vmem:[#allocation10 + $0x3c] sm:$0xf]
    %v1508 = vunpack.c.l.b16 %v1476
    %v1509 = vunpack.c.l.b16 %v1477
    %v1510 = vunpack.c.l.b16 %v1478
    %v1511 = vunpack.c.l.b16 %v1479
    %v1512 = vunpack.c.l.b16 %v1480
    %v1513 = vunpack.c.l.b16 %v1481
    %v1514 = vunpack.c.l.b16 %v1482
    %v1515 = vunpack.c.l.b16 %v1483
    %v1516 = vunpack.c.l.b16 %v1484
    %v1517 = vunpack.c.l.b16 %v1485
    %v1518 = vunpack.c.l.b16 %v1486
    %v1519 = vunpack.c.l.b16 %v1487
    %v1520 = vunpack.c.l.b16 %v1488
    %v1521 = vunpack.c.l.b16 %v1489
    %v1522 = vunpack.c.l.b16 %v1490
    %v1523 = vunpack.c.l.b16 %v1491
    %v1524 = vpack.c.b16 %v1509, %v1508
    %v1525 = vpack.c.b16 %v1511, %v1510
    %v1526 = vpack.c.b16 %v1513, %v1512
    %v1527 = vpack.c.b16 %v1515, %v1514
    %v1528 = vpack.c.b16 %v1517, %v1516
    %v1529 = vpack.c.b16 %v1519, %v1518
    %v1530 = vpack.c.b16 %v1521, %v1520
    %v1531 = vpack.c.b16 %v1523, %v1522
    %1540 = vmatprep.subr.bf16.mxu0 0
    %1541 = vmatpush1.bf16.msra.mxu0 %v1524
    %1542 = vmatprep.subr.bf16.mxu0 0
    %1543 = vmatpush1.bf16.msra.mxu0 %v1525
    %1544 = vmatprep.subr.bf16.mxu0 0
    %1545 = vmatpush1.bf16.msra.mxu0 %v1526
    %1546 = vmatprep.subr.bf16.mxu0 0
    %1547 = vmatpush1.bf16.msra.mxu0 %v1527
    %1548 = vmatprep.subr.bf16.mxu0 0
    %1549 = vmatpush1.bf16.msra.mxu0 %v1528
    %1550 = vmatprep.subr.bf16.mxu0 0
    %1551 = vmatpush1.bf16.msra.mxu0 %v1529
    %1552 = vmatprep.subr.bf16.mxu0 0
    %1553 = vmatpush1.bf16.msra.mxu0 %v1530
    %1554 = vmatprep.subr.bf16.mxu0 0
    %1555 = vmatpush1.bf16.msra.mxu0 %v1531
    %1556 = vmatprep.subr.bf16.mxu0 0
    %1557 = vmatpush1.bf16.msra.mxu0 0
    %1558 = vmatprep.subr.bf16.mxu0 0
    %1559 = vmatpush1.bf16.msra.mxu0 0
    %1560 = vmatprep.subr.bf16.mxu0 0
    %1561 = vmatpush1.bf16.msra.mxu0 0
    %1562 = vmatprep.subr.bf16.mxu0 0
    %1563 = vmatpush1.bf16.msra.mxu0 0
    %1564 = vmatprep.subr.bf16.mxu0 0
    %1565 = vmatpush1.bf16.msra.mxu0 0
    %1566 = vmatprep.subr.bf16.mxu0 0
    %1567 = vmatpush1.bf16.msra.mxu0 0
    %1568 = vmatprep.subr.bf16.mxu0 0
    %1569 = vmatpush1.bf16.msra.mxu0 0
    %1570 = vmatprep.subr.bf16.mxu0 0
    %1571 = vmatpush1.bf16.msra.mxu0 0
    %1572 = vmatprep.mubr.bf16.mxu0 0
    %1573 = vmatmul.mubr.bf16.gmra.mrb[0].mxu0 %v1460
    %v1574 = vpop.f32.mrb[0].mxu0
    %v1575 = vadd.f32 0.0, %v1574
    %v1576 = vpop.f32.mrb[0].mxu0
    %v1577 = vpop.f32.mrb[0].mxu0
    %v1578 = vadd.f32 0.0, %v1577
    %v1579 = vpop.f32.mrb[0].mxu0
    %1580 = vmatprep.mubr.bf16.mxu0 0
    %1581 = vmatmul.mubr.bf16.gmra.mrb[0].mxu0 %v1461
    %v1582 = vpop.f32.mrb[0].mxu0
    %v1583 = vadd.f32 0.0, %v1582
    %v1584 = vpop.f32.mrb[0].mxu0
    %v1585 = vpop.f32.mrb[0].mxu0
    %v1586 = vadd.f32 0.0, %v1585
    %v1587 = vpop.f32.mrb[0].mxu0
    %1588 = vmatprep.mubr.bf16.mxu0 0
    %1589 = vmatmul.mubr.bf16.gmra.mrb[0].mxu0 %v1462
    %v1590 = vpop.f32.mrb[0].mxu0
    %v1591 = vadd.f32 0.0, %v1590
    %v1592 = vpop.f32.mrb[0].mxu0
    %v1593 = vpop.f32.mrb[0].mxu0
    %v1594 = vadd.f32 0.0, %v1593
    %v1595 = vpop.f32.mrb[0].mxu0
    %1596 = vmatprep.mubr.bf16.mxu0 0
    %1597 = vmatmul.mubr.bf16.gmra.mrb[0].mxu0 %v1463
    %v1598 = vpop.f32.mrb[0].mxu0
    %v1599 = vadd.f32 0.0, %v1598
    %v1600 = vpop.f32.mrb[0].mxu0
    %v1601 = vpop.f32.mrb[0].mxu0
    %v1602 = vadd.f32 0.0, %v1601
    %v1603 = vpop.f32.mrb[0].mxu0
    %1604 = vmatprep.mubr.bf16.mxu0 0
    %1605 = vmatmul.mubr.bf16.gmra.mrb[0].mxu0 %v1464
    %v1606 = vpop.f32.mrb[0].mxu0
    %v1607 = vadd.f32 0.0, %v1606
    %v1608 = vpop.f32.mrb[0].mxu0
    %v1609 = vpop.f32.mrb[0].mxu0
    %v1610 = vadd.f32 0.0, %v1609
    %v1611 = vpop.f32.mrb[0].mxu0
    %1612 = vmatprep.mubr.bf16.mxu0 0
    %1613 = vmatmul.mubr.bf16.gmra.mrb[0].mxu0 %v1465
    %v1614 = vpop.f32.mrb[0].mxu0
    %v1615 = vadd.f32 0.0, %v1614
    %v1616 = vpop.f32.mrb[0].mxu0
    %v1617 = vpop.f32.mrb[0].mxu0
    %v1618 = vadd.f32 0.0, %v1617
    %v1619 = vpop.f32.mrb[0].mxu0
    %1620 = vmatprep.mubr.bf16.mxu0 0
    %1621 = vmatmul.mubr.bf16.gmra.mrb[0].mxu0 %v1466
    %v1622 = vpop.f32.mrb[0].mxu0
    %v1623 = vadd.f32 0.0, %v1622
    %v1624 = vpop.f32.mrb[0].mxu0
    %v1625 = vpop.f32.mrb[0].mxu0
    %v1626 = vadd.f32 0.0, %v1625
    %v1627 = vpop.f32.mrb[0].mxu0
    %1628 = vmatprep.mubr.bf16.mxu0 0
    %1629 = vmatmul.mubr.bf16.gmra.mrb[0].mxu0 %v1467
    %v1630 = vpop.f32.mrb[0].mxu0
    %v1631 = vadd.f32 0.0, %v1630
    %v1632 = vpop.f32.mrb[0].mxu0
    %v1633 = vpop.f32.mrb[0].mxu0
    %v1634 = vadd.f32 0.0, %v1633
    %v1635 = vpop.f32.mrb[0].mxu0
    %1636 = vmatprep.mubr.bf16.mxu0 0
    %1637 = vmatmul.mubr.bf16.gmra.mrb[0].mxu0 %v1468
    %v1638 = vpop.f32.mrb[0].mxu0
    %v1639 = vadd.f32 0.0, %v1638
    %v1640 = vpop.f32.mrb[0].mxu0
    %v1641 = vpop.f32.mrb[0].mxu0
    %v1642 = vadd.f32 0.0, %v1641
    %v1643 = vpop.f32.mrb[0].mxu0
    %1644 = vmatprep.mubr.bf16.mxu0 0
    %1645 = vmatmul.mubr.bf16.gmra.mrb[0].mxu0 %v1469
    %v1646 = vpop.f32.mrb[0].mxu0
    %v1647 = vadd.f32 0.0, %v1646
    %v1648 = vpop.f32.mrb[0].mxu0
    %v1649 = vpop.f32.mrb[0].mxu0
    %v1650 = vadd.f32 0.0, %v1649
    %v1651 = vpop.f32.mrb[0].mxu0
    %1652 = vmatprep.mubr.bf16.mxu0 0
    %1653 = vmatmul.mubr.bf16.gmra.mrb[0].mxu0 %v1470
    %v1654 = vpop.f32.mrb[0].mxu0
    %v1655 = vadd.f32 0.0, %v1654
    %v1656 = vpop.f32.mrb[0].mxu0
    %v1657 = vpop.f32.mrb[0].mxu0
    %v1658 = vadd.f32 0.0, %v1657
    %v1659 = vpop.f32.mrb[0].mxu0
    %1660 = vmatprep.mubr.bf16.mxu0 0
    %1661 = vmatmul.mubr.bf16.gmra.mrb[0].mxu0 %v1471
    %v1662 = vpop.f32.mrb[0].mxu0
    %v1663 = vadd.f32 0.0, %v1662
    %v1664 = vpop.f32.mrb[0].mxu0
    %v1665 = vpop.f32.mrb[0].mxu0
    %v1666 = vadd.f32 0.0, %v1665
    %v1667 = vpop.f32.mrb[0].mxu0
    %1668 = vmatprep.mubr.bf16.mxu0 0
    %1669 = vmatmul.mubr.bf16.gmra.mrb[0].mxu0 %v1472
    %v1670 = vpop.f32.mrb[0].mxu0
    %v1671 = vadd.f32 0.0, %v1670
    %v1672 = vpop.f32.mrb[0].mxu0
    %v1673 = vpop.f32.mrb[0].mxu0
    %v1674 = vadd.f32 0.0, %v1673
    %v1675 = vpop.f32.mrb[0].mxu0
    %1676 = vmatprep.mubr.bf16.mxu0 0
    %1677 = vmatmul.mubr.bf16.gmra.mrb[0].mxu0 %v1473
    %v1678 = vpop.f32.mrb[0].mxu0
    %v1679 = vadd.f32 0.0, %v1678
    %v1680 = vpop.f32.mrb[0].mxu0
    %v1681 = vpop.f32.mrb[0].mxu0
    %v1682 = vadd.f32 0.0, %v1681
    %v1683 = vpop.f32.mrb[0].mxu0
    %1684 = vmatprep.mubr.bf16.mxu0 0
    %1685 = vmatmul.mubr.bf16.gmra.mrb[0].mxu0 %v1474
    %v1686 = vpop.f32.mrb[0].mxu0
    %v1687 = vadd.f32 0.0, %v1686
    %v1688 = vpop.f32.mrb[0].mxu0
    %v1689 = vpop.f32.mrb[0].mxu0
    %v1690 = vadd.f32 0.0, %v1689
    %v1691 = vpop.f32.mrb[0].mxu0
    %1692 = vmatprep.mubr.bf16.mxu0 0
    %1693 = vmatmul.mubr.bf16.gmra.mrb[0].mxu0 %v1475
    %v1694 = vpop.f32.mrb[0].mxu0
    %v1695 = vadd.f32 0.0, %v1694
    %v1696 = vpop.f32.mrb[0].mxu0
    %v1697 = vpop.f32.mrb[0].mxu0
    %v1698 = vadd.f32 0.0, %v1697
    %v1699 = vpop.f32.mrb[0].mxu0
    %1700 = vdwg.mxu0
    %v1701 = vld [vmem:[#allocation5] sm:$0xff]
    %v1702 = vld [vmem:[#allocation5 + $0x8] sm:$0xff]
    %v1703 = vld [vmem:[#allocation5 + $0x10] sm:$0xff]
    %v1704 = vld [vmem:[#allocation5 + $0x18] sm:$0xff]
    %v1705 = vld [vmem:[#allocation5 + $0x20] sm:$0xff]
    %v1706 = vld [vmem:[#allocation5 + $0x28] sm:$0xff]
    %v1707 = vld [vmem:[#allocation5 + $0x30] sm:$0xff]
    %v1708 = vld [vmem:[#allocation5 + $0x38] sm:$0xff]
    %v1709 = vld [vmem:[#allocation5 + $0x40] sm:$0xff]
    %v1710 = vld [vmem:[#allocation5 + $0x48] sm:$0xff]
    %v1711 = vld [vmem:[#allocation5 + $0x50] sm:$0xff]
    %v1712 = vld [vmem:[#allocation5 + $0x58] sm:$0xff]
    %v1713 = vld [vmem:[#allocation5 + $0x60] sm:$0xff]
    %v1714 = vld [vmem:[#allocation5 + $0x68] sm:$0xff]
    %v1715 = vld [vmem:[#allocation5 + $0x70] sm:$0xff]
    %v1716 = vld [vmem:[#allocation5 + $0x78] sm:$0xff]
    %v1717 = vld [vmem:[#allocation5 + $0x80] sm:$0xff]
    %v1718 = vld [vmem:[#allocation5 + $0x88] sm:$0xff]
    %v1719 = vld [vmem:[#allocation5 + $0x90] sm:$0xff]
    %v1720 = vld [vmem:[#allocation5 + $0x98] sm:$0xff]
    %v1721 = vld [vmem:[#allocation5 + $0xa0] sm:$0xff]
    %v1722 = vld [vmem:[#allocation5 + $0xa8] sm:$0xff]
    %v1723 = vld [vmem:[#allocation5 + $0xb0] sm:$0xff]
    %v1724 = vld [vmem:[#allocation5 + $0xb8] sm:$0xff]
    %v1725 = vld [vmem:[#allocation5 + $0xc0] sm:$0xff]
    %v1726 = vld [vmem:[#allocation5 + $0xc8] sm:$0xff]
    %v1727 = vld [vmem:[#allocation5 + $0xd0] sm:$0xff]
    %v1728 = vld [vmem:[#allocation5 + $0xd8] sm:$0xff]
    %v1729 = vld [vmem:[#allocation5 + $0xe0] sm:$0xff]
    %v1730 = vld [vmem:[#allocation5 + $0xe8] sm:$0xff]
    %v1731 = vld [vmem:[#allocation5 + $0xf0] sm:$0xff]
    %v1732 = vld [vmem:[#allocation5 + $0xf8] sm:$0xff]
    %v1733 = vpack.c.bf16 %v1578, %v1575
    %v1734 = vpack.c.bf16 %v1586, %v1583
    %v1735 = vpack.c.bf16 %v1594, %v1591
    %v1736 = vpack.c.bf16 %v1602, %v1599
    %v1737 = vpack.c.bf16 %v1610, %v1607
    %v1738 = vpack.c.bf16 %v1618, %v1615
    %v1739 = vpack.c.bf16 %v1626, %v1623
    %v1740 = vpack.c.bf16 %v1634, %v1631
    %v1741 = vpack.c.bf16 %v1642, %v1639
    %v1742 = vpack.c.bf16 %v1650, %v1647
    %v1743 = vpack.c.bf16 %v1658, %v1655
    %v1744 = vpack.c.bf16 %v1666, %v1663
    %v1745 = vpack.c.bf16 %v1674, %v1671
    %v1746 = vpack.c.bf16 %v1682, %v1679
    %v1747 = vpack.c.bf16 %v1690, %v1687
    %v1748 = vpack.c.bf16 %v1698, %v1695
    %v1749 = vlaneseq
    %v1750 = vshrl.u32 %v1749, 7
    %v1751 = vsub.s32 5, %v1750
    %v1752 = vrot.slane %v110, %v1751
    %v1785 = vunpack.c.l.b16 %v1701
    %v1786 = vunpack.c.h.b16 %v1701
    %v1787 = vunpack.c.l.b16 %v1702
    %v1788 = vunpack.c.h.b16 %v1702
    %v1789 = vunpack.c.l.b16 %v1703
    %v1790 = vunpack.c.h.b16 %v1703
    %v1791 = vunpack.c.l.b16 %v1704
    %v1792 = vunpack.c.h.b16 %v1704
    %v1793 = vunpack.c.l.b16 %v1705
    %v1794 = vunpack.c.h.b16 %v1705
    %v1795 = vunpack.c.l.b16 %v1706
    %v1796 = vunpack.c.h.b16 %v1706
    %v1797 = vunpack.c.l.b16 %v1707
    %v1798 = vunpack.c.h.b16 %v1707
    %v1799 = vunpack.c.l.b16 %v1708
    %v1800 = vunpack.c.h.b16 %v1708
    %v1801 = vunpack.c.l.b16 %v1709
    %v1802 = vunpack.c.h.b16 %v1709
    %v1803 = vunpack.c.l.b16 %v1710
    %v1804 = vunpack.c.h.b16 %v1710
    %v1805 = vunpack.c.l.b16 %v1711
    %v1806 = vunpack.c.h.b16 %v1711
    %v1807 = vunpack.c.l.b16 %v1712
    %v1808 = vunpack.c.h.b16 %v1712
    %v1809 = vunpack.c.l.b16 %v1713
    %v1810 = vunpack.c.h.b16 %v1713
    %v1811 = vunpack.c.l.b16 %v1714
    %v1812 = vunpack.c.h.b16 %v1714
    %v1813 = vunpack.c.l.b16 %v1715
    %v1814 = vunpack.c.h.b16 %v1715
    %v1815 = vunpack.c.l.b16 %v1716
    %v1816 = vunpack.c.h.b16 %v1716
    %v1817 = vunpack.c.l.b16 %v1717
    %v1818 = vunpack.c.h.b16 %v1717
    %v1819 = vunpack.c.l.b16 %v1718
    %v1820 = vunpack.c.h.b16 %v1718
    %v1821 = vunpack.c.l.b16 %v1719
    %v1822 = vunpack.c.h.b16 %v1719
    %v1823 = vunpack.c.l.b16 %v1720
    %v1824 = vunpack.c.h.b16 %v1720
    %v1825 = vunpack.c.l.b16 %v1721
    %v1826 = vunpack.c.h.b16 %v1721
    %v1827 = vunpack.c.l.b16 %v1722
    %v1828 = vunpack.c.h.b16 %v1722
    %v1829 = vunpack.c.l.b16 %v1723
    %v1830 = vunpack.c.h.b16 %v1723
    %v1831 = vunpack.c.l.b16 %v1724
    %v1832 = vunpack.c.h.b16 %v1724
    %v1833 = vunpack.c.l.b16 %v1725
    %v1834 = vunpack.c.h.b16 %v1725
    %v1835 = vunpack.c.l.b16 %v1726
    %v1836 = vunpack.c.h.b16 %v1726
    %v1837 = vunpack.c.l.b16 %v1727
    %v1838 = vunpack.c.h.b16 %v1727
    %v1839 = vunpack.c.l.b16 %v1728
    %v1840 = vunpack.c.h.b16 %v1728
    %v1841 = vunpack.c.l.b16 %v1729
    %v1842 = vunpack.c.h.b16 %v1729
    %v1843 = vunpack.c.l.b16 %v1730
    %v1844 = vunpack.c.h.b16 %v1730
    %v1845 = vunpack.c.l.b16 %v1731
    %v1846 = vunpack.c.h.b16 %v1731
    %v1847 = vunpack.c.l.b16 %v1732
    %v1848 = vunpack.c.h.b16 %v1732
    %v1849 = vpack.c.b16 %v1787, %v1785
    %v1850 = vpack.c.b16 %v1788, %v1786
    %v1851 = vpack.c.b16 %v1791, %v1789
    %v1852 = vpack.c.b16 %v1792, %v1790
    %v1853 = vpack.c.b16 %v1795, %v1793
    %v1854 = vpack.c.b16 %v1796, %v1794
    %v1855 = vpack.c.b16 %v1799, %v1797
    %v1856 = vpack.c.b16 %v1800, %v1798
    %v1857 = vpack.c.b16 %v1803, %v1801
    %v1858 = vpack.c.b16 %v1804, %v1802
    %v1859 = vpack.c.b16 %v1807, %v1805
    %v1860 = vpack.c.b16 %v1808, %v1806
    %v1861 = vpack.c.b16 %v1811, %v1809
    %v1862 = vpack.c.b16 %v1812, %v1810
    %v1863 = vpack.c.b16 %v1815, %v1813
    %v1864 = vpack.c.b16 %v1816, %v1814
    %v1865 = vpack.c.b16 %v1819, %v1817
    %v1866 = vpack.c.b16 %v1820, %v1818
    %v1867 = vpack.c.b16 %v1823, %v1821
    %v1868 = vpack.c.b16 %v1824, %v1822
    %v1869 = vpack.c.b16 %v1827, %v1825
    %v1870 = vpack.c.b16 %v1828, %v1826
    %v1871 = vpack.c.b16 %v1831, %v1829
    %v1872 = vpack.c.b16 %v1832, %v1830
    %v1873 = vpack.c.b16 %v1835, %v1833
    %v1874 = vpack.c.b16 %v1836, %v1834
    %v1875 = vpack.c.b16 %v1839, %v1837
    %v1876 = vpack.c.b16 %v1840, %v1838
    %v1877 = vpack.c.b16 %v1843, %v1841
    %v1878 = vpack.c.b16 %v1844, %v1842
    %v1879 = vpack.c.b16 %v1847, %v1845
    %v1880 = vpack.c.b16 %v1848, %v1846
    %1913 = vmatprep.subr.bf16.mxu0 0
    %1914 = vmatpush1.bf16.msra.mxu0 %v1733
    %1915 = vmatprep.subr.bf16.mxu0 0
    %1916 = vmatpush1.bf16.msra.mxu0 %v1734
    %1917 = vmatprep.subr.bf16.mxu0 0
    %1918 = vmatpush1.bf16.msra.mxu0 %v1735
    %1919 = vmatprep.subr.bf16.mxu0 0
    %1920 = vmatpush1.bf16.msra.mxu0 %v1736
    %1921 = vmatprep.subr.bf16.mxu0 0
    %1922 = vmatpush1.bf16.msra.mxu0 %v1737
    %1923 = vmatprep.subr.bf16.mxu0 0
    %1924 = vmatpush1.bf16.msra.mxu0 %v1738
    %1925 = vmatprep.subr.bf16.mxu0 0
    %1926 = vmatpush1.bf16.msra.mxu0 %v1739
    %1927 = vmatprep.subr.bf16.mxu0 0
    %1928 = vmatpush1.bf16.msra.mxu0 %v1740
    %1929 = vmatprep.subr.bf16.mxu0 0
    %1930 = vmatpush1.bf16.msra.mxu0 %v1741
    %1931 = vmatprep.subr.bf16.mxu0 0
    %1932 = vmatpush1.bf16.msra.mxu0 %v1742
    %1933 = vmatprep.subr.bf16.mxu0 0
    %1934 = vmatpush1.bf16.msra.mxu0 %v1743
    %1935 = vmatprep.subr.bf16.mxu0 0
    %1936 = vmatpush1.bf16.msra.mxu0 %v1744
    %1937 = vmatprep.subr.bf16.mxu0 0
    %1938 = vmatpush1.bf16.msra.mxu0 %v1745
    %1939 = vmatprep.subr.bf16.mxu0 0
    %1940 = vmatpush1.bf16.msra.mxu0 %v1746
    %1941 = vmatprep.subr.bf16.mxu0 0
    %1942 = vmatpush1.bf16.msra.mxu0 %v1747
    %1943 = vmatprep.subr.bf16.mxu0 0
    %1944 = vmatpush1.bf16.msra.mxu0 %v1748
    %1945 = vmatprep.mubr.bf16.mxu0 %v1850
    %1946 = vmatmul.mubr.bf16.gmra.mrb[0].mxu0 %v1849
    %v1947 = vpop.f32.mrb[0].mxu0
    %v1948 = vadd.f32 %v1752, %v1947
    %v1949 = vpop.f32.mrb[0].mxu0
    %v1950 = vpop.f32.mrb[0].mxu0
    %v1951 = vadd.f32 %v1752, %v1950
    %v1952 = vpop.f32.mrb[0].mxu0
    %1953 = vmatprep.mubr.bf16.mxu0 %v1852
    %1954 = vmatmul.mubr.bf16.gmra.mrb[0].mxu0 %v1851
    %v1955 = vpop.f32.mrb[0].mxu0
    %v1956 = vadd.f32 %v1752, %v1955
    %v1957 = vpop.f32.mrb[0].mxu0
    %v1958 = vpop.f32.mrb[0].mxu0
    %v1959 = vadd.f32 %v1752, %v1958
    %v1960 = vpop.f32.mrb[0].mxu0
    %1961 = vmatprep.mubr.bf16.mxu0 %v1854
    %1962 = vmatmul.mubr.bf16.gmra.mrb[0].mxu0 %v1853
    %v1963 = vpop.f32.mrb[0].mxu0
    %v1964 = vadd.f32 %v1752, %v1963
    %v1965 = vpop.f32.mrb[0].mxu0
    %v1966 = vpop.f32.mrb[0].mxu0
    %v1967 = vadd.f32 %v1752, %v1966
    %v1968 = vpop.f32.mrb[0].mxu0
    %1969 = vmatprep.mubr.bf16.mxu0 %v1856
    %1970 = vmatmul.mubr.bf16.gmra.mrb[0].mxu0 %v1855
    %v1971 = vpop.f32.mrb[0].mxu0
    %v1972 = vadd.f32 %v1752, %v1971
    %v1973 = vpop.f32.mrb[0].mxu0
    %v1974 = vpop.f32.mrb[0].mxu0
    %v1975 = vadd.f32 %v1752, %v1974
    %v1976 = vpop.f32.mrb[0].mxu0
    %1977 = vmatprep.mubr.bf16.mxu0 %v1858
    %1978 = vmatmul.mubr.bf16.gmra.mrb[0].mxu0 %v1857
    %v1979 = vpop.f32.mrb[0].mxu0
    %v1980 = vadd.f32 %v1752, %v1979
    %v1981 = vpop.f32.mrb[0].mxu0
    %v1982 = vpop.f32.mrb[0].mxu0
    %v1983 = vadd.f32 %v1752, %v1982
    %v1984 = vpop.f32.mrb[0].mxu0
    %1985 = vmatprep.mubr.bf16.mxu0 %v1860
    %1986 = vmatmul.mubr.bf16.gmra.mrb[0].mxu0 %v1859
    %v1987 = vpop.f32.mrb[0].mxu0
    %v1988 = vadd.f32 %v1752, %v1987
    %v1989 = vpop.f32.mrb[0].mxu0
    %v1990 = vpop.f32.mrb[0].mxu0
    %v1991 = vadd.f32 %v1752, %v1990
    %v1992 = vpop.f32.mrb[0].mxu0
    %1993 = vmatprep.mubr.bf16.mxu0 %v1862
    %1994 = vmatmul.mubr.bf16.gmra.mrb[0].mxu0 %v1861
    %v1995 = vpop.f32.mrb[0].mxu0
    %v1996 = vadd.f32 %v1752, %v1995
    %v1997 = vpop.f32.mrb[0].mxu0
    %v1998 = vpop.f32.mrb[0].mxu0
    %v1999 = vadd.f32 %v1752, %v1998
    %v2000 = vpop.f32.mrb[0].mxu0
    %2001 = vmatprep.mubr.bf16.mxu0 %v1864
    %2002 = vmatmul.mubr.bf16.gmra.mrb[0].mxu0 %v1863
    %v2003 = vpop.f32.mrb[0].mxu0
    %v2004 = vadd.f32 %v1752, %v2003
    %v2005 = vpop.f32.mrb[0].mxu0
    %v2006 = vpop.f32.mrb[0].mxu0
    %v2007 = vadd.f32 %v1752, %v2006
    %v2008 = vpop.f32.mrb[0].mxu0
    %2009 = vmatprep.mubr.bf16.mxu0 %v1866
    %2010 = vmatmul.mubr.bf16.gmra.mrb[0].mxu0 %v1865
    %v2011 = vpop.f32.mrb[0].mxu0
    %v2012 = vadd.f32 %v1752, %v2011
    %v2013 = vpop.f32.mrb[0].mxu0
    %v2014 = vpop.f32.mrb[0].mxu0
    %v2015 = vadd.f32 %v1752, %v2014
    %v2016 = vpop.f32.mrb[0].mxu0
    %2017 = vmatprep.mubr.bf16.mxu0 %v1868
    %2018 = vmatmul.mubr.bf16.gmra.mrb[0].mxu0 %v1867
    %v2019 = vpop.f32.mrb[0].mxu0
    %v2020 = vadd.f32 %v1752, %v2019
    %v2021 = vpop.f32.mrb[0].mxu0
    %v2022 = vpop.f32.mrb[0].mxu0
    %v2023 = vadd.f32 %v1752, %v2022
    %v2024 = vpop.f32.mrb[0].mxu0
    %2025 = vmatprep.mubr.bf16.mxu0 %v1870
    %2026 = vmatmul.mubr.bf16.gmra.mrb[0].mxu0 %v1869
    %v2027 = vpop.f32.mrb[0].mxu0
    %v2028 = vadd.f32 %v1752, %v2027
    %v2029 = vpop.f32.mrb[0].mxu0
    %v2030 = vpop.f32.mrb[0].mxu0
    %v2031 = vadd.f32 %v1752, %v2030
    %v2032 = vpop.f32.mrb[0].mxu0
    %2033 = vmatprep.mubr.bf16.mxu0 %v1872
    %2034 = vmatmul.mubr.bf16.gmra.mrb[0].mxu0 %v1871
    %v2035 = vpop.f32.mrb[0].mxu0
    %v2036 = vadd.f32 %v1752, %v2035
    %v2037 = vpop.f32.mrb[0].mxu0
    %v2038 = vpop.f32.mrb[0].mxu0
    %v2039 = vadd.f32 %v1752, %v2038
    %v2040 = vpop.f32.mrb[0].mxu0
    %2041 = vmatprep.mubr.bf16.mxu0 %v1874
    %2042 = vmatmul.mubr.bf16.gmra.mrb[0].mxu0 %v1873
    %v2043 = vpop.f32.mrb[0].mxu0
    %v2044 = vadd.f32 %v1752, %v2043
    %v2045 = vpop.f32.mrb[0].mxu0
    %v2046 = vpop.f32.mrb[0].mxu0
    %v2047 = vadd.f32 %v1752, %v2046
    %v2048 = vpop.f32.mrb[0].mxu0
    %2049 = vmatprep.mubr.bf16.mxu0 %v1876
    %2050 = vmatmul.mubr.bf16.gmra.mrb[0].mxu0 %v1875
    %v2051 = vpop.f32.mrb[0].mxu0
    %v2052 = vadd.f32 %v1752, %v2051
    %v2053 = vpop.f32.mrb[0].mxu0
    %v2054 = vpop.f32.mrb[0].mxu0
    %v2055 = vadd.f32 %v1752, %v2054
    %v2056 = vpop.f32.mrb[0].mxu0
    %2057 = vmatprep.mubr.bf16.mxu0 %v1878
    %2058 = vmatmul.mubr.bf16.gmra.mrb[0].mxu0 %v1877
    %v2059 = vpop.f32.mrb[0].mxu0
    %v2060 = vadd.f32 %v1752, %v2059
    %v2061 = vpop.f32.mrb[0].mxu0
    %v2062 = vpop.f32.mrb[0].mxu0
    %v2063 = vadd.f32 %v1752, %v2062
    %v2064 = vpop.f32.mrb[0].mxu0
    %2065 = vmatprep.mubr.bf16.mxu0 %v1880
    %2066 = vmatmul.mubr.bf16.gmra.mrb[0].mxu0 %v1879
    %v2067 = vpop.f32.mrb[0].mxu0
    %v2068 = vadd.f32 %v1752, %v2067
    %v2069 = vpop.f32.mrb[0].mxu0
    %v2070 = vpop.f32.mrb[0].mxu0
    %v2071 = vadd.f32 %v1752, %v2070
    %v2072 = vpop.f32.mrb[0].mxu0
    %2073 = vdwg.mxu0
    %v2074 = vtanh.pop %v1948
    %v2075 = vtanh.pop %v1951
    %v2076 = vtanh.pop %v1956
    %v2077 = vtanh.pop %v1959
    %v2078 = vtanh.pop %v1964
    %v2079 = vtanh.pop %v1967
    %v2080 = vtanh.pop %v1972
    %v2081 = vtanh.pop %v1975
    %v2082 = vtanh.pop %v1980
    %v2083 = vtanh.pop %v1983
    %v2084 = vtanh.pop %v1988
    %v2085 = vtanh.pop %v1991
    %v2086 = vtanh.pop %v1996
    %v2087 = vtanh.pop %v1999
    %v2088 = vtanh.pop %v2004
    %v2089 = vtanh.pop %v2007
    %v2090 = vtanh.pop %v2012
    %v2091 = vtanh.pop %v2015
    %v2092 = vtanh.pop %v2020
    %v2093 = vtanh.pop %v2023
    %v2094 = vtanh.pop %v2028
    %v2095 = vtanh.pop %v2031
    %v2096 = vtanh.pop %v2036
    %v2097 = vtanh.pop %v2039
    %v2098 = vtanh.pop %v2044
    %v2099 = vtanh.pop %v2047
    %v2100 = vtanh.pop %v2052
    %v2101 = vtanh.pop %v2055
    %v2102 = vtanh.pop %v2060
    %v2103 = vtanh.pop %v2063
    %v2104 = vtanh.pop %v2068
    %v2105 = vtanh.pop %v2071
    %v2106 = vmul.f32 %v2074, %v972
    %v2107 = vmul.f32 %v2075, %v973
    %v2108 = vmul.f32 %v2076, %v974
    %v2109 = vmul.f32 %v2077, %v975
    %v2110 = vmul.f32 %v2078, %v976
    %v2111 = vmul.f32 %v2079, %v977
    %v2112 = vmul.f32 %v2080, %v978
    %v2113 = vmul.f32 %v2081, %v979
    %v2114 = vmul.f32 %v2082, %v980
    %v2115 = vmul.f32 %v2083, %v981
    %v2116 = vmul.f32 %v2084, %v982
    %v2117 = vmul.f32 %v2085, %v983
    %v2118 = vmul.f32 %v2086, %v984
    %v2119 = vmul.f32 %v2087, %v985
    %v2120 = vmul.f32 %v2088, %v986
    %v2121 = vmul.f32 %v2089, %v987
    %v2122 = vmul.f32 %v2090, %v988
    %v2123 = vmul.f32 %v2091, %v989
    %v2124 = vmul.f32 %v2092, %v990
    %v2125 = vmul.f32 %v2093, %v991
    %v2126 = vmul.f32 %v2094, %v992
    %v2127 = vmul.f32 %v2095, %v993
    %v2128 = vmul.f32 %v2096, %v994
    %v2129 = vmul.f32 %v2097, %v995
    %v2130 = vmul.f32 %v2098, %v996
    %v2131 = vmul.f32 %v2099, %v997
    %v2132 = vmul.f32 %v2100, %v998
    %v2133 = vmul.f32 %v2101, %v999
    %v2134 = vmul.f32 %v2102, %v1000
    %v2135 = vmul.f32 %v2103, %v1001
    %v2136 = vmul.f32 %v2104, %v1002
    %v2137 = vmul.f32 %v2105, %v1003
    %v2138 = vpack.c.bf16 %v2107, %v2106
    %v2139 = vpack.c.bf16 %v2109, %v2108
    %v2140 = vpack.c.bf16 %v2111, %v2110
    %v2141 = vpack.c.bf16 %v2113, %v2112
    %v2142 = vpack.c.bf16 %v2115, %v2114
    %v2143 = vpack.c.bf16 %v2117, %v2116
    %v2144 = vpack.c.bf16 %v2119, %v2118
    %v2145 = vpack.c.bf16 %v2121, %v2120
    %v2146 = vpack.c.bf16 %v2123, %v2122
    %v2147 = vpack.c.bf16 %v2125, %v2124
    %v2148 = vpack.c.bf16 %v2127, %v2126
    %v2149 = vpack.c.bf16 %v2129, %v2128
    %v2150 = vpack.c.bf16 %v2131, %v2130
    %v2151 = vpack.c.bf16 %v2133, %v2132
    %v2152 = vpack.c.bf16 %v2135, %v2134
    %v2153 = vpack.c.bf16 %v2137, %v2136
    %v2154 = vld [vmem:[#allocation11] sm:$0xf]
    %v2155 = vld [vmem:[#allocation11 + $0x4] sm:$0xf]
    %v2156 = vld [vmem:[#allocation11 + $0x8] sm:$0xf]
    %v2157 = vld [vmem:[#allocation11 + $0xc] sm:$0xf]
    %v2158 = vld [vmem:[#allocation11 + $0x10] sm:$0xf]
    %v2159 = vld [vmem:[#allocation11 + $0x14] sm:$0xf]
    %v2160 = vld [vmem:[#allocation11 + $0x18] sm:$0xf]
    %v2161 = vld [vmem:[#allocation11 + $0x1c] sm:$0xf]
    %v2162 = vld [vmem:[#allocation11 + $0x20] sm:$0xf]
    %v2163 = vld [vmem:[#allocation11 + $0x24] sm:$0xf]
    %v2164 = vld [vmem:[#allocation11 + $0x28] sm:$0xf]
    %v2165 = vld [vmem:[#allocation11 + $0x2c] sm:$0xf]
    %v2166 = vld [vmem:[#allocation11 + $0x30] sm:$0xf]
    %v2167 = vld [vmem:[#allocation11 + $0x34] sm:$0xf]
    %v2168 = vld [vmem:[#allocation11 + $0x38] sm:$0xf]
    %v2169 = vld [vmem:[#allocation11 + $0x3c] sm:$0xf]
    %v2170 = vlaneseq
    %v2171 = vshrl.u32 %v2170, 7
    %v2172 = vsub.s32 6, %v2171
    %v2173 = vrot.slane %v110, %v2172
    %v2190 = vunpack.c.l.b16 %v2154
    %v2191 = vunpack.c.l.b16 %v2155
    %v2192 = vunpack.c.l.b16 %v2156
    %v2193 = vunpack.c.l.b16 %v2157
    %v2194 = vunpack.c.l.b16 %v2158
    %v2195 = vunpack.c.l.b16 %v2159
    %v2196 = vunpack.c.l.b16 %v2160
    %v2197 = vunpack.c.l.b16 %v2161
    %v2198 = vunpack.c.l.b16 %v2162
    %v2199 = vunpack.c.l.b16 %v2163
    %v2200 = vunpack.c.l.b16 %v2164
    %v2201 = vunpack.c.l.b16 %v2165
    %v2202 = vunpack.c.l.b16 %v2166
    %v2203 = vunpack.c.l.b16 %v2167
    %v2204 = vunpack.c.l.b16 %v2168
    %v2205 = vunpack.c.l.b16 %v2169
    %v2206 = vpack.c.b16 %v2191, %v2190
    %v2207 = vpack.c.b16 %v2193, %v2192
    %v2208 = vpack.c.b16 %v2195, %v2194
    %v2209 = vpack.c.b16 %v2197, %v2196
    %v2210 = vpack.c.b16 %v2199, %v2198
    %v2211 = vpack.c.b16 %v2201, %v2200
    %v2212 = vpack.c.b16 %v2203, %v2202
    %v2213 = vpack.c.b16 %v2205, %v2204
    %2222 = vmatprep.subr.bf16.mxu0 0
    %2223 = vmatpush1.bf16.msra.mxu0 %v2206
    %2224 = vmatprep.subr.bf16.mxu0 0
    %2225 = vmatpush1.bf16.msra.mxu0 %v2207
    %2226 = vmatprep.subr.bf16.mxu0 0
    %2227 = vmatpush1.bf16.msra.mxu0 %v2208
    %2228 = vmatprep.subr.bf16.mxu0 0
    %2229 = vmatpush1.bf16.msra.mxu0 %v2209
    %2230 = vmatprep.subr.bf16.mxu0 0
    %2231 = vmatpush1.bf16.msra.mxu0 %v2210
    %2232 = vmatprep.subr.bf16.mxu0 0
    %2233 = vmatpush1.bf16.msra.mxu0 %v2211
    %2234 = vmatprep.subr.bf16.mxu0 0
    %2235 = vmatpush1.bf16.msra.mxu0 %v2212
    %2236 = vmatprep.subr.bf16.mxu0 0
    %2237 = vmatpush1.bf16.msra.mxu0 %v2213
    %2238 = vmatprep.subr.bf16.mxu0 0
    %2239 = vmatpush1.bf16.msra.mxu0 0
    %2240 = vmatprep.subr.bf16.mxu0 0
    %2241 = vmatpush1.bf16.msra.mxu0 0
    %2242 = vmatprep.subr.bf16.mxu0 0
    %2243 = vmatpush1.bf16.msra.mxu0 0
    %2244 = vmatprep.subr.bf16.mxu0 0
    %2245 = vmatpush1.bf16.msra.mxu0 0
    %2246 = vmatprep.subr.bf16.mxu0 0
    %2247 = vmatpush1.bf16.msra.mxu0 0
    %2248 = vmatprep.subr.bf16.mxu0 0
    %2249 = vmatpush1.bf16.msra.mxu0 0
    %2250 = vmatprep.subr.bf16.mxu0 0
    %2251 = vmatpush1.bf16.msra.mxu0 0
    %2252 = vmatprep.subr.bf16.mxu0 0
    %2253 = vmatpush1.bf16.msra.mxu0 0
    %2254 = vmatprep.mubr.bf16.mxu0 0
    %2255 = vmatmul.mubr.bf16.gmra.mrb[0].mxu0 %v2138
    %v2256 = vpop.f32.mrb[0].mxu0
    %v2257 = vadd.f32 %v2173, %v2256
    %v2258 = vpop.f32.mrb[0].mxu0
    %v2259 = vpop.f32.mrb[0].mxu0
    %v2260 = vadd.f32 %v2173, %v2259
    %v2261 = vpop.f32.mrb[0].mxu0
    %2262 = vmatprep.mubr.bf16.mxu0 0
    %2263 = vmatmul.mubr.bf16.gmra.mrb[0].mxu0 %v2139
    %v2264 = vpop.f32.mrb[0].mxu0
    %v2265 = vadd.f32 %v2173, %v2264
    %v2266 = vpop.f32.mrb[0].mxu0
    %v2267 = vpop.f32.mrb[0].mxu0
    %v2268 = vadd.f32 %v2173, %v2267
    %v2269 = vpop.f32.mrb[0].mxu0
    %2270 = vmatprep.mubr.bf16.mxu0 0
    %2271 = vmatmul.mubr.bf16.gmra.mrb[0].mxu0 %v2140
    %v2272 = vpop.f32.mrb[0].mxu0
    %v2273 = vadd.f32 %v2173, %v2272
    %v2274 = vpop.f32.mrb[0].mxu0
    %v2275 = vpop.f32.mrb[0].mxu0
    %v2276 = vadd.f32 %v2173, %v2275
    %v2277 = vpop.f32.mrb[0].mxu0
    %2278 = vmatprep.mubr.bf16.mxu0 0
    %2279 = vmatmul.mubr.bf16.gmra.mrb[0].mxu0 %v2141
    %v2280 = vpop.f32.mrb[0].mxu0
    %v2281 = vadd.f32 %v2173, %v2280
    %v2282 = vpop.f32.mrb[0].mxu0
    %v2283 = vpop.f32.mrb[0].mxu0
    %v2284 = vadd.f32 %v2173, %v2283
    %v2285 = vpop.f32.mrb[0].mxu0
    %2286 = vmatprep.mubr.bf16.mxu0 0
    %2287 = vmatmul.mubr.bf16.gmra.mrb[0].mxu0 %v2142
    %v2288 = vpop.f32.mrb[0].mxu0
    %v2289 = vadd.f32 %v2173, %v2288
    %v2290 = vpop.f32.mrb[0].mxu0
    %v2291 = vpop.f32.mrb[0].mxu0
    %v2292 = vadd.f32 %v2173, %v2291
    %v2293 = vpop.f32.mrb[0].mxu0
    %2294 = vmatprep.mubr.bf16.mxu0 0
    %2295 = vmatmul.mubr.bf16.gmra.mrb[0].mxu0 %v2143
    %v2296 = vpop.f32.mrb[0].mxu0
    %v2297 = vadd.f32 %v2173, %v2296
    %v2298 = vpop.f32.mrb[0].mxu0
    %v2299 = vpop.f32.mrb[0].mxu0
    %v2300 = vadd.f32 %v2173, %v2299
    %v2301 = vpop.f32.mrb[0].mxu0
    %2302 = vmatprep.mubr.bf16.mxu0 0
    %2303 = vmatmul.mubr.bf16.gmra.mrb[0].mxu0 %v2144
    %v2304 = vpop.f32.mrb[0].mxu0
    %v2305 = vadd.f32 %v2173, %v2304
    %v2306 = vpop.f32.mrb[0].mxu0
    %v2307 = vpop.f32.mrb[0].mxu0
    %v2308 = vadd.f32 %v2173, %v2307
    %v2309 = vpop.f32.mrb[0].mxu0
    %2310 = vmatprep.mubr.bf16.mxu0 0
    %2311 = vmatmul.mubr.bf16.gmra.mrb[0].mxu0 %v2145
    %v2312 = vpop.f32.mrb[0].mxu0
    %v2313 = vadd.f32 %v2173, %v2312
    %v2314 = vpop.f32.mrb[0].mxu0
    %v2315 = vpop.f32.mrb[0].mxu0
    %v2316 = vadd.f32 %v2173, %v2315
    %v2317 = vpop.f32.mrb[0].mxu0
    %2318 = vmatprep.mubr.bf16.mxu0 0
    %2319 = vmatmul.mubr.bf16.gmra.mrb[0].mxu0 %v2146
    %v2320 = vpop.f32.mrb[0].mxu0
    %v2321 = vadd.f32 %v2173, %v2320
    %v2322 = vpop.f32.mrb[0].mxu0
    %v2323 = vpop.f32.mrb[0].mxu0
    %v2324 = vadd.f32 %v2173, %v2323
    %v2325 = vpop.f32.mrb[0].mxu0
    %2326 = vmatprep.mubr.bf16.mxu0 0
    %2327 = vmatmul.mubr.bf16.gmra.mrb[0].mxu0 %v2147
    %v2328 = vpop.f32.mrb[0].mxu0
    %v2329 = vadd.f32 %v2173, %v2328
    %v2330 = vpop.f32.mrb[0].mxu0
    %v2331 = vpop.f32.mrb[0].mxu0
    %v2332 = vadd.f32 %v2173, %v2331
    %v2333 = vpop.f32.mrb[0].mxu0
    %2334 = vmatprep.mubr.bf16.mxu0 0
    %2335 = vmatmul.mubr.bf16.gmra.mrb[0].mxu0 %v2148
    %v2336 = vpop.f32.mrb[0].mxu0
    %v2337 = vadd.f32 %v2173, %v2336
    %v2338 = vpop.f32.mrb[0].mxu0
    %v2339 = vpop.f32.mrb[0].mxu0
    %v2340 = vadd.f32 %v2173, %v2339
    %v2341 = vpop.f32.mrb[0].mxu0
    %2342 = vmatprep.mubr.bf16.mxu0 0
    %2343 = vmatmul.mubr.bf16.gmra.mrb[0].mxu0 %v2149
    %v2344 = vpop.f32.mrb[0].mxu0
    %v2345 = vadd.f32 %v2173, %v2344
    %v2346 = vpop.f32.mrb[0].mxu0
    %v2347 = vpop.f32.mrb[0].mxu0
    %v2348 = vadd.f32 %v2173, %v2347
    %v2349 = vpop.f32.mrb[0].mxu0
    %2350 = vmatprep.mubr.bf16.mxu0 0
    %2351 = vmatmul.mubr.bf16.gmra.mrb[0].mxu0 %v2150
    %v2352 = vpop.f32.mrb[0].mxu0
    %v2353 = vadd.f32 %v2173, %v2352
    %v2354 = vpop.f32.mrb[0].mxu0
    %v2355 = vpop.f32.mrb[0].mxu0
    %v2356 = vadd.f32 %v2173, %v2355
    %v2357 = vpop.f32.mrb[0].mxu0
    %2358 = vmatprep.mubr.bf16.mxu0 0
    %2359 = vmatmul.mubr.bf16.gmra.mrb[0].mxu0 %v2151
    %v2360 = vpop.f32.mrb[0].mxu0
    %v2361 = vadd.f32 %v2173, %v2360
    %v2362 = vpop.f32.mrb[0].mxu0
    %v2363 = vpop.f32.mrb[0].mxu0
    %v2364 = vadd.f32 %v2173, %v2363
    %v2365 = vpop.f32.mrb[0].mxu0
    %2366 = vmatprep.mubr.bf16.mxu0 0
    %2367 = vmatmul.mubr.bf16.gmra.mrb[0].mxu0 %v2152
    %v2368 = vpop.f32.mrb[0].mxu0
    %v2369 = vadd.f32 %v2173, %v2368
    %v2370 = vpop.f32.mrb[0].mxu0
    %v2371 = vpop.f32.mrb[0].mxu0
    %v2372 = vadd.f32 %v2173, %v2371
    %v2373 = vpop.f32.mrb[0].mxu0
    %2374 = vmatprep.mubr.bf16.mxu0 0
    %2375 = vmatmul.mubr.bf16.gmra.mrb[0].mxu0 %v2153
    %v2376 = vpop.f32.mrb[0].mxu0
    %v2377 = vadd.f32 %v2173, %v2376
    %v2378 = vpop.f32.mrb[0].mxu0
    %v2379 = vpop.f32.mrb[0].mxu0
    %v2380 = vadd.f32 %v2173, %v2379
    %v2381 = vpop.f32.mrb[0].mxu0
    %2382 = vdwg.mxu0
    %2383 = vst [vmem:[#allocation13] sm:$0xff] %v2257
    %2384 = vst [vmem:[#allocation13 + $0x8] sm:$0xff] %v2260
    %2385 = vst [vmem:[#allocation13 + $0x10] sm:$0xff] %v2265
    %2386 = vst [vmem:[#allocation13 + $0x18] sm:$0xff] %v2268
    %2387 = vst [vmem:[#allocation13 + $0x20] sm:$0xff] %v2273
    %2388 = vst [vmem:[#allocation13 + $0x28] sm:$0xff] %v2276
    %2389 = vst [vmem:[#allocation13 + $0x30] sm:$0xff] %v2281
    %2390 = vst [vmem:[#allocation13 + $0x38] sm:$0xff] %v2284
    %2391 = vst [vmem:[#allocation13 + $0x40] sm:$0xff] %v2289
    %2392 = vst [vmem:[#allocation13 + $0x48] sm:$0xff] %v2292
    %2393 = vst [vmem:[#allocation13 + $0x50] sm:$0xff] %v2297
    %2394 = vst [vmem:[#allocation13 + $0x58] sm:$0xff] %v2300
    %2395 = vst [vmem:[#allocation13 + $0x60] sm:$0xff] %v2305
    %2396 = vst [vmem:[#allocation13 + $0x68] sm:$0xff] %v2308
    %2397 = vst [vmem:[#allocation13 + $0x70] sm:$0xff] %v2313
    %2398 = vst [vmem:[#allocation13 + $0x78] sm:$0xff] %v2316
    %2399 = vst [vmem:[#allocation13 + $0x80] sm:$0xff] %v2321
    %2400 = vst [vmem:[#allocation13 + $0x88] sm:$0xff] %v2324
    %2401 = vst [vmem:[#allocation13 + $0x90] sm:$0xff] %v2329
    %2402 = vst [vmem:[#allocation13 + $0x98] sm:$0xff] %v2332
    %2403 = vst [vmem:[#allocation13 + $0xa0] sm:$0xff] %v2337
    %2404 = vst [vmem:[#allocation13 + $0xa8] sm:$0xff] %v2340
    %2405 = vst [vmem:[#allocation13 + $0xb0] sm:$0xff] %v2345
    %2406 = vst [vmem:[#allocation13 + $0xb8] sm:$0xff] %v2348
    %2407 = vst [vmem:[#allocation13 + $0xc0] sm:$0xff] %v2353
    %2408 = vst [vmem:[#allocation13 + $0xc8] sm:$0xff] %v2356
    %2409 = vst [vmem:[#allocation13 + $0xd0] sm:$0xff] %v2361
    %2410 = vst [vmem:[#allocation13 + $0xd8] sm:$0xff] %v2364
    %2411 = vst [vmem:[#allocation13 + $0xe0] sm:$0xff] %v2369
    %2412 = vst [vmem:[#allocation13 + $0xe8] sm:$0xff] %v2372
    %2413 = vst [vmem:[#allocation13 + $0xf0] sm:$0xff] %v2377
    %2414 = vst [vmem:[#allocation13 + $0xf8] sm:$0xff] %v2380
    // Predicated region
    $region50: #{tpu_custom_call.1} parent=1 // pred_check
      _
    $region51: #{tpu_custom_call.1} parent=1 // pred_check_branch
      %2416 = sbr.rel (0) target = $region53
    $region52: #{tpu_custom_call.1} parent=1 // pred_region
      %s2418 = ssub.s32 4096, 4096
      %2419 = vsyncadd [#allocation4], %s2418
      %s2420 = sshll.u32 [#allocation13], 4
      %s2421 = int_to_ptr.vmem [resolvable:$true] %s2420
      %2426 = dma.vmem_to_hbm [thread:$0]  %s2421, 4096, %s6, [#allocation4], 128, 128, 8
    $region53: #{tpu_custom_call.1} parent=1 // pred_fallthru
      _
    // Predicated region
    $region54: #{tpu_custom_call.1} parent=1 // pred_check
      _
    $region55: #{tpu_custom_call.1} parent=1 // pred_check_branch
      %2428 = sbr.rel (0) target = $region57
    $region56: #{tpu_custom_call.1} parent=1 // pred_region
      %2429 = dma.done [#allocation4], 4096
    $region57: #{tpu_custom_call.1} parent=1 // pred_fallthru
      _
    %2430 = vsyncpa [#allocation3], 1
    %2431 = vsyncpa [#allocation6], 1
    %2432 = vsyncpa [#allocation9], 1
    %2433 = vsyncpa [#allocation12], 1
    %2434 = vsyncpa [#allocation4], 1

</llo_original>
